<compile_context>
chip_gen: v7x
topology: tpu7x:2x2x1
jax: 0.10.0
libtpu: 0.0.40
codegen_flags: <defaults>
</compile_context>

<pallas_src>
import math

import jax
import jax.numpy as jnp
from jax.experimental import pallas as pl
from jax.experimental.pallas import tpu as pltpu

# ---- small shapes consistent with the module -------------------------------
B = 2          # batch
S = 8          # sequence length
D_MODEL = 128  # d_model (kept small; module default middle_dim preserved)
MIDDLE = 2048  # FeedForward default middle_dim


def feedforward_kernel(x_ref, w1_ref, b1_ref, w2_ref, b2_ref, o_ref):
    """Single grid step: whole (M, D) activation slab, VMEM-resident bf16 weights."""
    x = x_ref[...].astype(jnp.bfloat16)              # (M, D)

    # fc1 + bias + ReLU  (bf16 MXU matmul, f32 accumulate, f32 epilogue so the
    # elementwise work stays on v5e's f32-only VPU path)
    h = jnp.dot(x, w1_ref[...], preferred_element_type=jnp.float32)
    h = jnp.maximum(h + b1_ref[...], 0.0)            # (M, MIDDLE) f32

    # dropout (p=0.1) in inference mode => identity.
    # fc2 + bias
    y = jnp.dot(h.astype(jnp.bfloat16), w2_ref[...],
                preferred_element_type=jnp.float32) + b2_ref[...]

    o_ref[...] = y.astype(o_ref.dtype)               # (M, D)


def feedforward(x, params):
    """x: (B, S, D) f32. params: (w1, b1, w2, b2) with weights pre-transposed
    to (in, out) so the kernel computes y = x @ W + b (PyTorch stores (out, in))."""
    w1, b1, w2, b2 = params
    b, s, d = x.shape
    m = b * s
    assert d == w1.shape[0] and m % 8 == 0

    x2 = x.reshape(m, d)                      # fold batch+seq -> lane-dense slab
    w1b = w1.astype(jnp.bfloat16)             # halve HBM weight traffic
    w2b = w2.astype(jnp.bfloat16)

    # Weights/biases have a constant index_map -> no need for double buffers.
    resident = dict(pipeline_mode=pl.Buffered(1))

    out = pl.pallas_call(
        feedforward_kernel,
        out_shape=jax.ShapeDtypeStruct((m, d), x.dtype),
        grid=(1,),                            # single step: no per-step overhead
        in_specs=[
            pl.BlockSpec((m, d), lambda i: (0, 0)),              # activations
            pl.BlockSpec(w1b.shape, lambda i: (0, 0), **resident),  # w1 (resident)
            pl.BlockSpec(b1.shape, lambda i: (0, 0), **resident),   # b1
            pl.BlockSpec(w2b.shape, lambda i: (0, 0), **resident),  # w2 (resident)
            pl.BlockSpec(b2.shape, lambda i: (0, 0), **resident),   # b2
        ],
        out_specs=pl.BlockSpec((m, d), lambda i: (0, 0)),
        compiler_params=pltpu.CompilerParams(
            # DMA-bound with shared weights: do NOT megacore-shard on v7x
            # (each TC would re-fetch its own weight copy).
            dimension_semantics=("arbitrary",),
            vmem_limit_bytes=16 * 1024 * 1024,   # real footprint ~1.5 MiB
        ),
    )(x2, w1b, b1, w2b, b2)

    return out.reshape(b, s, d)


# ---------------------------- parameter init --------------------------------
def _linear_params(key, fan_in, fan_out):
    """PyTorch nn.Linear default init; weight returned pre-transposed (in, out)."""
    kw, kb = jax.random.split(key)
    bound = 1.0 / math.sqrt(fan_in)
    w = jax.random.uniform(kw, (fan_in, fan_out), jnp.float32, -bound, bound)
    b = jax.random.uniform(kb, (1, fan_out), jnp.float32, -bound, bound)
    return w, b


def init_params(key):
    k1, k2 = jax.random.split(key)
    w1, b1 = _linear_params(k1, D_MODEL, MIDDLE)
    w2, b2 = _linear_params(k2, MIDDLE, D_MODEL)
    return (w1, b1, w2, b2)


# ------------------------- plain-JAX reference -------------------------------
def ref_feedforward(x, params):
    w1, b1, w2, b2 = params
    h = jax.nn.relu(x @ w1 + b1[0])
    return h @ w2 + b2[0]


if __name__ == "__main__":
    key = jax.random.PRNGKey(0)
    kx, kp = jax.random.split(key)

    x = jax.random.normal(kx, (B, S, D_MODEL), jnp.float32)
    params = init_params(kp)

    out = feedforward(x, params)
    out = jax.block_until_ready(out)

    ref = ref_feedforward(x, params)          # f32 reference
    assert out.shape == (B, S, D_MODEL)
    # tolerance loosened because kernel uses bf16 weights/activations on the MXU
    assert jnp.allclose(out, ref, rtol=5e-2, atol=5e-2), (
        f"max abs err {jnp.max(jnp.abs(out - ref))}")

    print("KERNEL_OK")
</pallas_src>

<mosaic_0001>
module attributes {stable_mosaic.version = 11 : i64} {
  func.func @feedforward_kernel(%arg0: i32, %arg1: memref<16x128xf32, #tpu.memory_space<vmem>>, %arg2: memref<128x2048xbf16, #tpu.memory_space<vmem>>, %arg3: memref<1x2048xf32, #tpu.memory_space<vmem>>, %arg4: memref<2048x128xbf16, #tpu.memory_space<vmem>>, %arg5: memref<1x128xf32, #tpu.memory_space<vmem>>, %arg6: memref<16x128xf32, #tpu.memory_space<vmem>>) attributes {dimension_semantics = [#tpu.dimension_semantics<arbitrary>], iteration_bounds = array<i64: 1>, scalar_prefetch = 0 : i64, scratch_operands = 0 : i64, tpu.core_type = #tpu.core_type<tc>, window_params = [{pipeline_mode = #tpu.pipeline_mode<synchronous>, transform_indices = @transform_0, window_bounds = array<i64: 16, 128>}, {pipeline_mode = #tpu.pipeline_mode<synchronous>, transform_indices = @transform_1, window_bounds = array<i64: 128, 2048>}, {pipeline_mode = #tpu.pipeline_mode<synchronous>, transform_indices = @transform_2, window_bounds = array<i64: 1, 2048>}, {pipeline_mode = #tpu.pipeline_mode<synchronous>, transform_indices = @transform_3, window_bounds = array<i64: 2048, 128>}, {pipeline_mode = #tpu.pipeline_mode<synchronous>, transform_indices = @transform_4, window_bounds = array<i64: 1, 128>}, {pipeline_mode = #tpu.pipeline_mode<synchronous>, transform_indices = @transform_5, window_bounds = array<i64: 16, 128>}]} {
    %c0 = arith.constant 0 : index
    %c0_0 = arith.constant 0 : index
    %0 = vector.load %arg1[%c0, %c0_0] : memref<16x128xf32, #tpu.memory_space<vmem>>, vector<16x128xf32>
    %1 = arith.truncf %0 : vector<16x128xf32> to vector<16x128xbf16>
    %c0_1 = arith.constant 0 : index
    %c0_2 = arith.constant 0 : index
    %2 = vector.load %arg2[%c0_1, %c0_2] : memref<128x2048xbf16, #tpu.memory_space<vmem>>, vector<128x2048xbf16>
    %cst = arith.constant dense<0.000000e+00> : vector<16x2048xf32>
    %3 = tpu.matmul %1, %2, %cst {dimension_numbers = #tpu.dot_dimension_numbers<[1], [0], [0], [1], [0, 0, 1, 1], [], []>} : vector<16x128xbf16>, vector<128x2048xbf16>, vector<16x2048xf32> -> vector<16x2048xf32>
    %c0_3 = arith.constant 0 : index
    %c0_4 = arith.constant 0 : index
    %4 = vector.load %arg3[%c0_3, %c0_4] : memref<1x2048xf32, #tpu.memory_space<vmem>>, vector<1x2048xf32>
    %5 = vector.broadcast %4 : vector<1x2048xf32> to vector<16x2048xf32>
    %6 = arith.addf %3, %5 : vector<16x2048xf32>
    %cst_5 = arith.constant 0.000000e+00 : f32
    %7 = vector.broadcast %cst_5 : f32 to vector<16x2048xf32>
    %8 = arith.maximumf %6, %7 : vector<16x2048xf32>
    %9 = arith.truncf %8 : vector<16x2048xf32> to vector<16x2048xbf16>
    %c0_6 = arith.constant 0 : index
    %c0_7 = arith.constant 0 : index
    %10 = vector.load %arg4[%c0_6, %c0_7] : memref<2048x128xbf16, #tpu.memory_space<vmem>>, vector<2048x128xbf16>
    %cst_8 = arith.constant dense<0.000000e+00> : vector<16x128xf32>
    %11 = tpu.matmul %9, %10, %cst_8 {dimension_numbers = #tpu.dot_dimension_numbers<[1], [0], [0], [1], [0, 0, 1, 1], [], []>} : vector<16x2048xbf16>, vector<2048x128xbf16>, vector<16x128xf32> -> vector<16x128xf32>
    %c0_9 = arith.constant 0 : index
    %c0_10 = arith.constant 0 : index
    %12 = vector.load %arg5[%c0_9, %c0_10] : memref<1x128xf32, #tpu.memory_space<vmem>>, vector<1x128xf32>
    %13 = vector.broadcast %12 : vector<1x128xf32> to vector<16x128xf32>
    %14 = arith.addf %11, %13 : vector<16x128xf32>
    %c0_11 = arith.constant 0 : index
    %c0_12 = arith.constant 0 : index
    %15 = vector.load %arg6[%c0_11, %c0_12] : memref<16x128xf32, #tpu.memory_space<vmem>>, vector<16x128xf32>
    tpu.vector_store %arg6[%c0_11, %c0_12], %14 {strides = array<i32>} : memref<16x128xf32, #tpu.memory_space<vmem>>, vector<16x128xf32>,
    return
  }
  func.func @transform_0(%arg0: i32) -> (i32, i32) {
    %c0_i32 = arith.constant 0 : i32
    %c0_i32_0 = arith.constant 0 : i32
    %c0_i32_1 = arith.constant 0 : i32
    return %c0_i32, %c0_i32_0 : i32, i32
  }
  func.func @transform_1(%arg0: i32) -> (i32, i32) {
    %c0_i32 = arith.constant 0 : i32
    %c0_i32_0 = arith.constant 0 : i32
    %c0_i32_1 = arith.constant 0 : i32
    return %c0_i32, %c0_i32_0 : i32, i32
  }
  func.func @transform_2(%arg0: i32) -> (i32, i32) {
    %c0_i32 = arith.constant 0 : i32
    %c0_i32_0 = arith.constant 0 : i32
    %c0_i32_1 = arith.constant 0 : i32
    return %c0_i32, %c0_i32_0 : i32, i32
  }
  func.func @transform_3(%arg0: i32) -> (i32, i32) {
    %c0_i32 = arith.constant 0 : i32
    %c0_i32_0 = arith.constant 0 : i32
    %c0_i32_1 = arith.constant 0 : i32
    return %c0_i32, %c0_i32_0 : i32, i32
  }
  func.func @transform_4(%arg0: i32) -> (i32, i32) {
    %c0_i32 = arith.constant 0 : i32
    %c0_i32_0 = arith.constant 0 : i32
    %c0_i32_1 = arith.constant 0 : i32
    return %c0_i32, %c0_i32_0 : i32, i32
  }
  func.func @transform_5(%arg0: i32) -> (i32, i32) {
    %c0_i32 = arith.constant 0 : i32
    %c0_i32_0 = arith.constant 0 : i32
    %c0_i32_1 = arith.constant 0 : i32
    return %c0_i32, %c0_i32_0 : i32, i32
  }
}

</mosaic_0001>

<llo_original>
// kernel: tpu_custom_call.1
$region0: #{tpu_custom_call.1}
  #allocation0 [shape = 'u32[]', space=smem, size = 0x4, offset = 0x4, fixed_abs, tag = 'smem constant byte address 0x4 - core index']
  #allocation1 [shape = 'u32[144,128]{1,0:T(1,128)}', space=vmem, size = 0x12000, scoped, tag = 'internal scratch']
  %s0 = inlined_call_operand.hbm [shape: f32[16,128], index: 0, kind: input, shape index: {}]
  %s1 = inlined_call_operand.hbm [shape: bf16[128,2048], index: 1, kind: input, shape index: {}]
  %s2 = inlined_call_operand.hbm [shape: f32[1,2048], index: 2, kind: input, shape index: {}]
  %s3 = inlined_call_operand.hbm [shape: bf16[2048,128], index: 3, kind: input, shape index: {}]
  %s4 = inlined_call_operand.vmem [shape: f32[1,128], index: 4, kind: input, shape index: {}]
  %s5 = inlined_call_operand.hbm [shape: f32[16,128], index: 5, kind: output, shape index: {}]
  %s6 = sld [smem:[#allocation0]]
  $region46: #{tpu_custom_call.1} parent=0
    _
  %s8 = ssub.s32 1, %s6
  %s9 = scalar_select 0, %s8, %s6
  $region1: #{tpu_custom_call.1} parent=0
    #allocation2 [shape = 'u8[8192]{0}', space=vmem, size = 0x2000, scoped, tag = 'input window, operand 0, single buffered']
    #allocation3 [shape = 's32[1]{0}', space=sflag, size = 0x4, scoped, tag = 'scoped memory for tpu_custom_call.1']
    #allocation4 [shape = 's32[1]{0}', space=sflag, size = 0x4, scoped, tag = 'scoped memory for tpu_custom_call.1']
    #allocation5 [shape = 'u8[524288]{0}', space=vmem, size = 0x80000, scoped, tag = 'input window, operand 1, single buffered']
    #allocation6 [shape = 's32[1]{0}', space=sflag, size = 0x4, scoped, tag = 'scoped memory for tpu_custom_call.1']
    #allocation7 [shape = 'u8[8192]{0}', space=vmem, size = 0x2000, scoped, tag = 'input window, operand 2, single buffered']
    #allocation8 [shape = 'u8[524288]{0}', space=vmem, size = 0x80000, scoped, tag = 'input window, operand 3, single buffered']
    #allocation9 [shape = 's32[1]{0}', space=sflag, size = 0x4, scoped, tag = 'scoped memory for tpu_custom_call.1']
    #allocation10 [shape = 'u8[8192]{0}', space=vmem, size = 0x2000, scoped, tag = 'output window, operand 0, single buffered']
    %10 = vsyncpa [#allocation3], 0
    %11 = vsyncpa [#allocation6], 0
    %12 = vsyncpa [#allocation9], 0
    %13 = vsyncpa [#allocation4], 0
    // Predicated region
    $region2: #{tpu_custom_call.1} parent=1 // pred_check
      _
    $region3: #{tpu_custom_call.1} parent=1 // pred_check_branch
      %15 = sbr.rel (0) target = $region5
    $region4: #{tpu_custom_call.1} parent=1 // pred_region
      %s17 = ssub.s32 256, 256
      %18 = vsyncadd [#allocation3], %s17
      %s19 = sshll.u32 [#allocation2], 4
      %s20 = int_to_ptr.vmem [resolvable:$true] %s19
      %25 = dma.hbm_to_vmem [thread:$0]  %s0, 256, %s20, [#allocation3], 128, 128, 8
    $region5: #{tpu_custom_call.1} parent=1 // pred_fallthru
      _
    // Predicated region
    $region6: #{tpu_custom_call.1} parent=1 // pred_check
      _
    $region7: #{tpu_custom_call.1} parent=1 // pred_check_branch
      %27 = sbr.rel (0) target = $region9
    $region8: #{tpu_custom_call.1} parent=1 // pred_region
      %s29 = ssub.s32 16384, 16384
      %30 = vsyncadd [#allocation6], %s29
      %s31 = sshll.u32 [#allocation5], 4
      %s32 = int_to_ptr.vmem [resolvable:$true] %s31
      %37 = dma.hbm_to_vmem [thread:$0]  %s1, 16384, %s32, [#allocation6], 1024, 1024, 64
    $region9: #{tpu_custom_call.1} parent=1 // pred_fallthru
      _
    // Predicated region
    $region10: #{tpu_custom_call.1} parent=1 // pred_check
      _
    $region11: #{tpu_custom_call.1} parent=1 // pred_check_branch
      %39 = sbr.rel (0) target = $region13
    $region12: #{tpu_custom_call.1} parent=1 // pred_region
      %s41 = ssub.s32 256, 256
      %42 = vsyncadd [#allocation6], %s41
      %s44 = sshll.u32 [#allocation7], 4
      %s45 = int_to_ptr.vmem [resolvable:$true] %s44
      %47 = dma.hbm_to_vmem [thread:$0]  %s2, 256, %s45, [#allocation6]
    $region13: #{tpu_custom_call.1} parent=1 // pred_fallthru
      _
    // Predicated region
    $region14: #{tpu_custom_call.1} parent=1 // pred_check
      _
    $region15: #{tpu_custom_call.1} parent=1 // pred_check_branch
      %49 = sbr.rel (0) target = $region17
    $region16: #{tpu_custom_call.1} parent=1 // pred_region
      %s51 = ssub.s32 16384, 16384
      %52 = vsyncadd [#allocation9], %s51
      %s53 = sshll.u32 [#allocation8], 4
      %s54 = int_to_ptr.vmem [resolvable:$true] %s53
      %59 = dma.hbm_to_vmem [thread:$0]  %s3, 16384, %s54, [#allocation9], 64, 64, 4
    $region17: #{tpu_custom_call.1} parent=1 // pred_fallthru
      _
    // Predicated region
    $region18: #{tpu_custom_call.1} parent=1 // pred_check
      _
    $region19: #{tpu_custom_call.1} parent=1 // pred_check_branch
      %61 = sbr.rel (0) target = $region21
    $region20: #{tpu_custom_call.1} parent=1 // pred_region
      _
    $region21: #{tpu_custom_call.1} parent=1 // pred_fallthru
      _
    // Predicated region
    $region22: #{tpu_custom_call.1} parent=1 // pred_check
      _
    $region23: #{tpu_custom_call.1} parent=1 // pred_check_branch
      %63 = sbr.rel (0) target = $region25
    $region24: #{tpu_custom_call.1} parent=1 // pred_region
      %64 = dma.done [#allocation3], 256
    $region25: #{tpu_custom_call.1} parent=1 // pred_fallthru
      _
    // Predicated region
    $region26: #{tpu_custom_call.1} parent=1 // pred_check
      _
    $region27: #{tpu_custom_call.1} parent=1 // pred_check_branch
      %66 = sbr.rel (0) target = $region29
    $region28: #{tpu_custom_call.1} parent=1 // pred_region
      %67 = dma.done [#allocation6], 16384
    $region29: #{tpu_custom_call.1} parent=1 // pred_fallthru
      _
    // Predicated region
    $region30: #{tpu_custom_call.1} parent=1 // pred_check
      _
    $region31: #{tpu_custom_call.1} parent=1 // pred_check_branch
      %69 = sbr.rel (0) target = $region33
    $region32: #{tpu_custom_call.1} parent=1 // pred_region
      %70 = dma.done [#allocation6], 256
    $region33: #{tpu_custom_call.1} parent=1 // pred_fallthru
      _
    // Predicated region
    $region34: #{tpu_custom_call.1} parent=1 // pred_check
      _
    $region35: #{tpu_custom_call.1} parent=1 // pred_check_branch
      %72 = sbr.rel (0) target = $region37
    $region36: #{tpu_custom_call.1} parent=1 // pred_region
      %73 = dma.done [#allocation9], 16384
    $region37: #{tpu_custom_call.1} parent=1 // pred_fallthru
      _
    %v75 = vld [vmem:[#allocation2] sm:$0xff]
    %v76 = vld [vmem:[#allocation2 + $0x8] sm:$0xff]
    %v77 = vpack.c.bf16 %v76, %v75
    %v78 = vld [vmem:[#allocation5] sm:$0xff]
    %v79 = vld [vmem:[#allocation5 + $0x8] sm:$0xff]
    %v80 = vld [vmem:[#allocation5 + $0x10] sm:$0xff]
    %v81 = vld [vmem:[#allocation5 + $0x18] sm:$0xff]
    %v82 = vld [vmem:[#allocation5 + $0x20] sm:$0xff]
    %v83 = vld [vmem:[#allocation5 + $0x28] sm:$0xff]
    %v84 = vld [vmem:[#allocation5 + $0x30] sm:$0xff]
    %v85 = vld [vmem:[#allocation5 + $0x38] sm:$0xff]
    %v86 = vld [vmem:[#allocation5 + $0x40] sm:$0xff]
    %v87 = vld [vmem:[#allocation5 + $0x48] sm:$0xff]
    %v88 = vld [vmem:[#allocation5 + $0x50] sm:$0xff]
    %v89 = vld [vmem:[#allocation5 + $0x58] sm:$0xff]
    %v90 = vld [vmem:[#allocation5 + $0x60] sm:$0xff]
    %v91 = vld [vmem:[#allocation5 + $0x68] sm:$0xff]
    %v92 = vld [vmem:[#allocation5 + $0x70] sm:$0xff]
    %v93 = vld [vmem:[#allocation5 + $0x78] sm:$0xff]
    %v94 = vld [vmem:[#allocation5 + $0x80] sm:$0xff]
    %v95 = vld [vmem:[#allocation5 + $0x88] sm:$0xff]
    %v96 = vld [vmem:[#allocation5 + $0x90] sm:$0xff]
    %v97 = vld [vmem:[#allocation5 + $0x98] sm:$0xff]
    %v98 = vld [vmem:[#allocation5 + $0xa0] sm:$0xff]
    %v99 = vld [vmem:[#allocation5 + $0xa8] sm:$0xff]
    %v100 = vld [vmem:[#allocation5 + $0xb0] sm:$0xff]
    %v101 = vld [vmem:[#allocation5 + $0xb8] sm:$0xff]
    %v102 = vld [vmem:[#allocation5 + $0xc0] sm:$0xff]
    %v103 = vld [vmem:[#allocation5 + $0xc8] sm:$0xff]
    %v104 = vld [vmem:[#allocation5 + $0xd0] sm:$0xff]
    %v105 = vld [vmem:[#allocation5 + $0xd8] sm:$0xff]
    %v106 = vld [vmem:[#allocation5 + $0xe0] sm:$0xff]
    %v107 = vld [vmem:[#allocation5 + $0xe8] sm:$0xff]
    %v108 = vld [vmem:[#allocation5 + $0xf0] sm:$0xff]
    %v109 = vld [vmem:[#allocation5 + $0xf8] sm:$0xff]
    %v110 = vld [vmem:[#allocation5 + $0x100] sm:$0xff]
    %v111 = vld [vmem:[#allocation5 + $0x108] sm:$0xff]
    %v112 = vld [vmem:[#allocation5 + $0x110] sm:$0xff]
    %v113 = vld [vmem:[#allocation5 + $0x118] sm:$0xff]
    %v114 = vld [vmem:[#allocation5 + $0x120] sm:$0xff]
    %v115 = vld [vmem:[#allocation5 + $0x128] sm:$0xff]
    %v116 = vld [vmem:[#allocation5 + $0x130] sm:$0xff]
    %v117 = vld [vmem:[#allocation5 + $0x138] sm:$0xff]
    %v118 = vld [vmem:[#allocation5 + $0x140] sm:$0xff]
    %v119 = vld [vmem:[#allocation5 + $0x148] sm:$0xff]
    %v120 = vld [vmem:[#allocation5 + $0x150] sm:$0xff]
    %v121 = vld [vmem:[#allocation5 + $0x158] sm:$0xff]
    %v122 = vld [vmem:[#allocation5 + $0x160] sm:$0xff]
    %v123 = vld [vmem:[#allocation5 + $0x168] sm:$0xff]
    %v124 = vld [vmem:[#allocation5 + $0x170] sm:$0xff]
    %v125 = vld [vmem:[#allocation5 + $0x178] sm:$0xff]
    %v126 = vld [vmem:[#allocation5 + $0x180] sm:$0xff]
    %v127 = vld [vmem:[#allocation5 + $0x188] sm:$0xff]
    %v128 = vld [vmem:[#allocation5 + $0x190] sm:$0xff]
    %v129 = vld [vmem:[#allocation5 + $0x198] sm:$0xff]
    %v130 = vld [vmem:[#allocation5 + $0x1a0] sm:$0xff]
    %v131 = vld [vmem:[#allocation5 + $0x1a8] sm:$0xff]
    %v132 = vld [vmem:[#allocation5 + $0x1b0] sm:$0xff]
    %v133 = vld [vmem:[#allocation5 + $0x1b8] sm:$0xff]
    %v134 = vld [vmem:[#allocation5 + $0x1c0] sm:$0xff]
    %v135 = vld [vmem:[#allocation5 + $0x1c8] sm:$0xff]
    %v136 = vld [vmem:[#allocation5 + $0x1d0] sm:$0xff]
    %v137 = vld [vmem:[#allocation5 + $0x1d8] sm:$0xff]
    %v138 = vld [vmem:[#allocation5 + $0x1e0] sm:$0xff]
    %v139 = vld [vmem:[#allocation5 + $0x1e8] sm:$0xff]
    %v140 = vld [vmem:[#allocation5 + $0x1f0] sm:$0xff]
    %v141 = vld [vmem:[#allocation5 + $0x1f8] sm:$0xff]
    %v142 = vld [vmem:[#allocation5 + $0x200] sm:$0xff]
    %v143 = vld [vmem:[#allocation5 + $0x208] sm:$0xff]
    %v144 = vld [vmem:[#allocation5 + $0x210] sm:$0xff]
    %v145 = vld [vmem:[#allocation5 + $0x218] sm:$0xff]
    %v146 = vld [vmem:[#allocation5 + $0x220] sm:$0xff]
    %v147 = vld [vmem:[#allocation5 + $0x228] sm:$0xff]
    %v148 = vld [vmem:[#allocation5 + $0x230] sm:$0xff]
    %v149 = vld [vmem:[#allocation5 + $0x238] sm:$0xff]
    %v150 = vld [vmem:[#allocation5 + $0x240] sm:$0xff]
    %v151 = vld [vmem:[#allocation5 + $0x248] sm:$0xff]
    %v152 = vld [vmem:[#allocation5 + $0x250] sm:$0xff]
    %v153 = vld [vmem:[#allocation5 + $0x258] sm:$0xff]
    %v154 = vld [vmem:[#allocation5 + $0x260] sm:$0xff]
    %v155 = vld [vmem:[#allocation5 + $0x268] sm:$0xff]
    %v156 = vld [vmem:[#allocation5 + $0x270] sm:$0xff]
    %v157 = vld [vmem:[#allocation5 + $0x278] sm:$0xff]
    %v158 = vld [vmem:[#allocation5 + $0x280] sm:$0xff]
    %v159 = vld [vmem:[#allocation5 + $0x288] sm:$0xff]
    %v160 = vld [vmem:[#allocation5 + $0x290] sm:$0xff]
    %v161 = vld [vmem:[#allocation5 + $0x298] sm:$0xff]
    %v162 = vld [vmem:[#allocation5 + $0x2a0] sm:$0xff]
    %v163 = vld [vmem:[#allocation5 + $0x2a8] sm:$0xff]
    %v164 = vld [vmem:[#allocation5 + $0x2b0] sm:$0xff]
    %v165 = vld [vmem:[#allocation5 + $0x2b8] sm:$0xff]
    %v166 = vld [vmem:[#allocation5 + $0x2c0] sm:$0xff]
    %v167 = vld [vmem:[#allocation5 + $0x2c8] sm:$0xff]
    %v168 = vld [vmem:[#allocation5 + $0x2d0] sm:$0xff]
    %v169 = vld [vmem:[#allocation5 + $0x2d8] sm:$0xff]
    %v170 = vld [vmem:[#allocation5 + $0x2e0] sm:$0xff]
    %v171 = vld [vmem:[#allocation5 + $0x2e8] sm:$0xff]
    %v172 = vld [vmem:[#allocation5 + $0x2f0] sm:$0xff]
    %v173 = vld [vmem:[#allocation5 + $0x2f8] sm:$0xff]
    %v174 = vld [vmem:[#allocation5 + $0x300] sm:$0xff]
    %v175 = vld [vmem:[#allocation5 + $0x308] sm:$0xff]
    %v176 = vld [vmem:[#allocation5 + $0x310] sm:$0xff]
    %v177 = vld [vmem:[#allocation5 + $0x318] sm:$0xff]
    %v178 = vld [vmem:[#allocation5 + $0x320] sm:$0xff]
    %v179 = vld [vmem:[#allocation5 + $0x328] sm:$0xff]
    %v180 = vld [vmem:[#allocation5 + $0x330] sm:$0xff]
    %v181 = vld [vmem:[#allocation5 + $0x338] sm:$0xff]
    %v182 = vld [vmem:[#allocation5 + $0x340] sm:$0xff]
    %v183 = vld [vmem:[#allocation5 + $0x348] sm:$0xff]
    %v184 = vld [vmem:[#allocation5 + $0x350] sm:$0xff]
    %v185 = vld [vmem:[#allocation5 + $0x358] sm:$0xff]
    %v186 = vld [vmem:[#allocation5 + $0x360] sm:$0xff]
    %v187 = vld [vmem:[#allocation5 + $0x368] sm:$0xff]
    %v188 = vld [vmem:[#allocation5 + $0x370] sm:$0xff]
    %v189 = vld [vmem:[#allocation5 + $0x378] sm:$0xff]
    %v190 = vld [vmem:[#allocation5 + $0x380] sm:$0xff]
    %v191 = vld [vmem:[#allocation5 + $0x388] sm:$0xff]
    %v192 = vld [vmem:[#allocation5 + $0x390] sm:$0xff]
    %v193 = vld [vmem:[#allocation5 + $0x398] sm:$0xff]
    %v194 = vld [vmem:[#allocation5 + $0x3a0] sm:$0xff]
    %v195 = vld [vmem:[#allocation5 + $0x3a8] sm:$0xff]
    %v196 = vld [vmem:[#allocation5 + $0x3b0] sm:$0xff]
    %v197 = vld [vmem:[#allocation5 + $0x3b8] sm:$0xff]
    %v198 = vld [vmem:[#allocation5 + $0x3c0] sm:$0xff]
    %v199 = vld [vmem:[#allocation5 + $0x3c8] sm:$0xff]
    %v200 = vld [vmem:[#allocation5 + $0x3d0] sm:$0xff]
    %v201 = vld [vmem:[#allocation5 + $0x3d8] sm:$0xff]
    %v202 = vld [vmem:[#allocation5 + $0x3e0] sm:$0xff]
    %v203 = vld [vmem:[#allocation5 + $0x3e8] sm:$0xff]
    %v204 = vld [vmem:[#allocation5 + $0x3f0] sm:$0xff]
    %v205 = vld [vmem:[#allocation5 + $0x3f8] sm:$0xff]
    %v206 = vld [vmem:[#allocation7] sm:$0xff]
    %v207 = vld [vmem:[#allocation7 + $0x8] sm:$0xff]
    %v210 = vlaneseq
    %v211 = vshrl.u32 %v210, 7
    %v212 = vsub.s32 0, %v211
    %v213 = vrot.slane %v206, %v212
    %v214 = vlaneseq
    %v215 = vshrl.u32 %v214, 7
    %v216 = vsub.s32 1, %v215
    %v217 = vrot.slane %v206, %v216
    %v218 = vlaneseq
    %v219 = vshrl.u32 %v218, 7
    %v220 = vsub.s32 2, %v219
    %v221 = vrot.slane %v206, %v220
    %v222 = vlaneseq
    %v223 = vshrl.u32 %v222, 7
    %v224 = vsub.s32 3, %v223
    %v225 = vrot.slane %v206, %v224
    %v226 = vlaneseq
    %v227 = vshrl.u32 %v226, 7
    %v228 = vsub.s32 4, %v227
    %v229 = vrot.slane %v206, %v228
    %v230 = vlaneseq
    %v231 = vshrl.u32 %v230, 7
    %v232 = vsub.s32 5, %v231
    %v233 = vrot.slane %v206, %v232
    %v234 = vlaneseq
    %v235 = vshrl.u32 %v234, 7
    %v236 = vsub.s32 6, %v235
    %v237 = vrot.slane %v206, %v236
    %v238 = vlaneseq
    %v239 = vshrl.u32 %v238, 7
    %v240 = vsub.s32 7, %v239
    %v241 = vrot.slane %v206, %v240
    %v242 = vlaneseq
    %v243 = vshrl.u32 %v242, 7
    %v244 = vsub.s32 0, %v243
    %v245 = vrot.slane %v207, %v244
    %v246 = vlaneseq
    %v247 = vshrl.u32 %v246, 7
    %v248 = vsub.s32 1, %v247
    %v249 = vrot.slane %v207, %v248
    %v250 = vlaneseq
    %v251 = vshrl.u32 %v250, 7
    %v252 = vsub.s32 2, %v251
    %v253 = vrot.slane %v207, %v252
    %v254 = vlaneseq
    %v255 = vshrl.u32 %v254, 7
    %v256 = vsub.s32 3, %v255
    %v257 = vrot.slane %v207, %v256
    %v258 = vlaneseq
    %v259 = vshrl.u32 %v258, 7
    %v260 = vsub.s32 4, %v259
    %v261 = vrot.slane %v207, %v260
    %v262 = vlaneseq
    %v263 = vshrl.u32 %v262, 7
    %v264 = vsub.s32 5, %v263
    %v265 = vrot.slane %v207, %v264
    %v266 = vlaneseq
    %v267 = vshrl.u32 %v266, 7
    %v268 = vsub.s32 6, %v267
    %v269 = vrot.slane %v207, %v268
    %v270 = vlaneseq
    %v271 = vshrl.u32 %v270, 7
    %v272 = vsub.s32 7, %v271
    %v273 = vrot.slane %v207, %v272
    %v418 = vunpack.c.l.b16 %v78
    %v419 = vunpack.c.h.b16 %v78
    %v420 = vunpack.c.l.b16 %v79
    %v421 = vunpack.c.h.b16 %v79
    %v422 = vunpack.c.l.b16 %v80
    %v423 = vunpack.c.h.b16 %v80
    %v424 = vunpack.c.l.b16 %v81
    %v425 = vunpack.c.h.b16 %v81
    %v426 = vunpack.c.l.b16 %v82
    %v427 = vunpack.c.h.b16 %v82
    %v428 = vunpack.c.l.b16 %v83
    %v429 = vunpack.c.h.b16 %v83
    %v430 = vunpack.c.l.b16 %v84
    %v431 = vunpack.c.h.b16 %v84
    %v432 = vunpack.c.l.b16 %v85
    %v433 = vunpack.c.h.b16 %v85
    %v434 = vunpack.c.l.b16 %v86
    %v435 = vunpack.c.h.b16 %v86
    %v436 = vunpack.c.l.b16 %v87
    %v437 = vunpack.c.h.b16 %v87
    %v438 = vunpack.c.l.b16 %v88
    %v439 = vunpack.c.h.b16 %v88
    %v440 = vunpack.c.l.b16 %v89
    %v441 = vunpack.c.h.b16 %v89
    %v442 = vunpack.c.l.b16 %v90
    %v443 = vunpack.c.h.b16 %v90
    %v444 = vunpack.c.l.b16 %v91
    %v445 = vunpack.c.h.b16 %v91
    %v446 = vunpack.c.l.b16 %v92
    %v447 = vunpack.c.h.b16 %v92
    %v448 = vunpack.c.l.b16 %v93
    %v449 = vunpack.c.h.b16 %v93
    %v450 = vunpack.c.l.b16 %v94
    %v451 = vunpack.c.h.b16 %v94
    %v452 = vunpack.c.l.b16 %v95
    %v453 = vunpack.c.h.b16 %v95
    %v454 = vunpack.c.l.b16 %v96
    %v455 = vunpack.c.h.b16 %v96
    %v456 = vunpack.c.l.b16 %v97
    %v457 = vunpack.c.h.b16 %v97
    %v458 = vunpack.c.l.b16 %v98
    %v459 = vunpack.c.h.b16 %v98
    %v460 = vunpack.c.l.b16 %v99
    %v461 = vunpack.c.h.b16 %v99
    %v462 = vunpack.c.l.b16 %v100
    %v463 = vunpack.c.h.b16 %v100
    %v464 = vunpack.c.l.b16 %v101
    %v465 = vunpack.c.h.b16 %v101
    %v466 = vunpack.c.l.b16 %v102
    %v467 = vunpack.c.h.b16 %v102
    %v468 = vunpack.c.l.b16 %v103
    %v469 = vunpack.c.h.b16 %v103
    %v470 = vunpack.c.l.b16 %v104
    %v471 = vunpack.c.h.b16 %v104
    %v472 = vunpack.c.l.b16 %v105
    %v473 = vunpack.c.h.b16 %v105
    %v474 = vunpack.c.l.b16 %v106
    %v475 = vunpack.c.h.b16 %v106
    %v476 = vunpack.c.l.b16 %v107
    %v477 = vunpack.c.h.b16 %v107
    %v478 = vunpack.c.l.b16 %v108
    %v479 = vunpack.c.h.b16 %v108
    %v480 = vunpack.c.l.b16 %v109
    %v481 = vunpack.c.h.b16 %v109
    %v482 = vunpack.c.l.b16 %v110
    %v483 = vunpack.c.h.b16 %v110
    %v484 = vunpack.c.l.b16 %v111
    %v485 = vunpack.c.h.b16 %v111
    %v486 = vunpack.c.l.b16 %v112
    %v487 = vunpack.c.h.b16 %v112
    %v488 = vunpack.c.l.b16 %v113
    %v489 = vunpack.c.h.b16 %v113
    %v490 = vunpack.c.l.b16 %v114
    %v491 = vunpack.c.h.b16 %v114
    %v492 = vunpack.c.l.b16 %v115
    %v493 = vunpack.c.h.b16 %v115
    %v494 = vunpack.c.l.b16 %v116
    %v495 = vunpack.c.h.b16 %v116
    %v496 = vunpack.c.l.b16 %v117
    %v497 = vunpack.c.h.b16 %v117
    %v498 = vunpack.c.l.b16 %v118
    %v499 = vunpack.c.h.b16 %v118
    %v500 = vunpack.c.l.b16 %v119
    %v501 = vunpack.c.h.b16 %v119
    %v502 = vunpack.c.l.b16 %v120
    %v503 = vunpack.c.h.b16 %v120
    %v504 = vunpack.c.l.b16 %v121
    %v505 = vunpack.c.h.b16 %v121
    %v506 = vunpack.c.l.b16 %v122
    %v507 = vunpack.c.h.b16 %v122
    %v508 = vunpack.c.l.b16 %v123
    %v509 = vunpack.c.h.b16 %v123
    %v510 = vunpack.c.l.b16 %v124
    %v511 = vunpack.c.h.b16 %v124
    %v512 = vunpack.c.l.b16 %v125
    %v513 = vunpack.c.h.b16 %v125
    %v514 = vunpack.c.l.b16 %v126
    %v515 = vunpack.c.h.b16 %v126
    %v516 = vunpack.c.l.b16 %v127
    %v517 = vunpack.c.h.b16 %v127
    %v518 = vunpack.c.l.b16 %v128
    %v519 = vunpack.c.h.b16 %v128
    %v520 = vunpack.c.l.b16 %v129
    %v521 = vunpack.c.h.b16 %v129
    %v522 = vunpack.c.l.b16 %v130
    %v523 = vunpack.c.h.b16 %v130
    %v524 = vunpack.c.l.b16 %v131
    %v525 = vunpack.c.h.b16 %v131
    %v526 = vunpack.c.l.b16 %v132
    %v527 = vunpack.c.h.b16 %v132
    %v528 = vunpack.c.l.b16 %v133
    %v529 = vunpack.c.h.b16 %v133
    %v530 = vunpack.c.l.b16 %v134
    %v531 = vunpack.c.h.b16 %v134
    %v532 = vunpack.c.l.b16 %v135
    %v533 = vunpack.c.h.b16 %v135
    %v534 = vunpack.c.l.b16 %v136
    %v535 = vunpack.c.h.b16 %v136
    %v536 = vunpack.c.l.b16 %v137
    %v537 = vunpack.c.h.b16 %v137
    %v538 = vunpack.c.l.b16 %v138
    %v539 = vunpack.c.h.b16 %v138
    %v540 = vunpack.c.l.b16 %v139
    %v541 = vunpack.c.h.b16 %v139
    %v542 = vunpack.c.l.b16 %v140
    %v543 = vunpack.c.h.b16 %v140
    %v544 = vunpack.c.l.b16 %v141
    %v545 = vunpack.c.h.b16 %v141
    %v546 = vunpack.c.l.b16 %v142
    %v547 = vunpack.c.h.b16 %v142
    %v548 = vunpack.c.l.b16 %v143
    %v549 = vunpack.c.h.b16 %v143
    %v550 = vunpack.c.l.b16 %v144
    %v551 = vunpack.c.h.b16 %v144
    %v552 = vunpack.c.l.b16 %v145
    %v553 = vunpack.c.h.b16 %v145
    %v554 = vunpack.c.l.b16 %v146
    %v555 = vunpack.c.h.b16 %v146
    %v556 = vunpack.c.l.b16 %v147
    %v557 = vunpack.c.h.b16 %v147
    %v558 = vunpack.c.l.b16 %v148
    %v559 = vunpack.c.h.b16 %v148
    %v560 = vunpack.c.l.b16 %v149
    %v561 = vunpack.c.h.b16 %v149
    %v562 = vunpack.c.l.b16 %v150
    %v563 = vunpack.c.h.b16 %v150
    %v564 = vunpack.c.l.b16 %v151
    %v565 = vunpack.c.h.b16 %v151
    %v566 = vunpack.c.l.b16 %v152
    %v567 = vunpack.c.h.b16 %v152
    %v568 = vunpack.c.l.b16 %v153
    %v569 = vunpack.c.h.b16 %v153
    %v570 = vunpack.c.l.b16 %v154
    %v571 = vunpack.c.h.b16 %v154
    %v572 = vunpack.c.l.b16 %v155
    %v573 = vunpack.c.h.b16 %v155
    %v574 = vunpack.c.l.b16 %v156
    %v575 = vunpack.c.h.b16 %v156
    %v576 = vunpack.c.l.b16 %v157
    %v577 = vunpack.c.h.b16 %v157
    %v578 = vunpack.c.l.b16 %v158
    %v579 = vunpack.c.h.b16 %v158
    %v580 = vunpack.c.l.b16 %v159
    %v581 = vunpack.c.h.b16 %v159
    %v582 = vunpack.c.l.b16 %v160
    %v583 = vunpack.c.h.b16 %v160
    %v584 = vunpack.c.l.b16 %v161
    %v585 = vunpack.c.h.b16 %v161
    %v586 = vunpack.c.l.b16 %v162
    %v587 = vunpack.c.h.b16 %v162
    %v588 = vunpack.c.l.b16 %v163
    %v589 = vunpack.c.h.b16 %v163
    %v590 = vunpack.c.l.b16 %v164
    %v591 = vunpack.c.h.b16 %v164
    %v592 = vunpack.c.l.b16 %v165
    %v593 = vunpack.c.h.b16 %v165
    %v594 = vunpack.c.l.b16 %v166
    %v595 = vunpack.c.h.b16 %v166
    %v596 = vunpack.c.l.b16 %v167
    %v597 = vunpack.c.h.b16 %v167
    %v598 = vunpack.c.l.b16 %v168
    %v599 = vunpack.c.h.b16 %v168
    %v600 = vunpack.c.l.b16 %v169
    %v601 = vunpack.c.h.b16 %v169
    %v602 = vunpack.c.l.b16 %v170
    %v603 = vunpack.c.h.b16 %v170
    %v604 = vunpack.c.l.b16 %v171
    %v605 = vunpack.c.h.b16 %v171
    %v606 = vunpack.c.l.b16 %v172
    %v607 = vunpack.c.h.b16 %v172
    %v608 = vunpack.c.l.b16 %v173
    %v609 = vunpack.c.h.b16 %v173
    %v610 = vunpack.c.l.b16 %v174
    %v611 = vunpack.c.h.b16 %v174
    %v612 = vunpack.c.l.b16 %v175
    %v613 = vunpack.c.h.b16 %v175
    %v614 = vunpack.c.l.b16 %v176
    %v615 = vunpack.c.h.b16 %v176
    %v616 = vunpack.c.l.b16 %v177
    %v617 = vunpack.c.h.b16 %v177
    %v618 = vunpack.c.l.b16 %v178
    %v619 = vunpack.c.h.b16 %v178
    %v620 = vunpack.c.l.b16 %v179
    %v621 = vunpack.c.h.b16 %v179
    %v622 = vunpack.c.l.b16 %v180
    %v623 = vunpack.c.h.b16 %v180
    %v624 = vunpack.c.l.b16 %v181
    %v625 = vunpack.c.h.b16 %v181
    %v626 = vunpack.c.l.b16 %v182
    %v627 = vunpack.c.h.b16 %v182
    %v628 = vunpack.c.l.b16 %v183
    %v629 = vunpack.c.h.b16 %v183
    %v630 = vunpack.c.l.b16 %v184
    %v631 = vunpack.c.h.b16 %v184
    %v632 = vunpack.c.l.b16 %v185
    %v633 = vunpack.c.h.b16 %v185
    %v634 = vunpack.c.l.b16 %v186
    %v635 = vunpack.c.h.b16 %v186
    %v636 = vunpack.c.l.b16 %v187
    %v637 = vunpack.c.h.b16 %v187
    %v638 = vunpack.c.l.b16 %v188
    %v639 = vunpack.c.h.b16 %v188
    %v640 = vunpack.c.l.b16 %v189
    %v641 = vunpack.c.h.b16 %v189
    %v642 = vunpack.c.l.b16 %v190
    %v643 = vunpack.c.h.b16 %v190
    %v644 = vunpack.c.l.b16 %v191
    %v645 = vunpack.c.h.b16 %v191
    %v646 = vunpack.c.l.b16 %v192
    %v647 = vunpack.c.h.b16 %v192
    %v648 = vunpack.c.l.b16 %v193
    %v649 = vunpack.c.h.b16 %v193
    %v650 = vunpack.c.l.b16 %v194
    %v651 = vunpack.c.h.b16 %v194
    %v652 = vunpack.c.l.b16 %v195
    %v653 = vunpack.c.h.b16 %v195
    %v654 = vunpack.c.l.b16 %v196
    %v655 = vunpack.c.h.b16 %v196
    %v656 = vunpack.c.l.b16 %v197
    %v657 = vunpack.c.h.b16 %v197
    %v658 = vunpack.c.l.b16 %v198
    %v659 = vunpack.c.h.b16 %v198
    %v660 = vunpack.c.l.b16 %v199
    %v661 = vunpack.c.h.b16 %v199
    %v662 = vunpack.c.l.b16 %v200
    %v663 = vunpack.c.h.b16 %v200
    %v664 = vunpack.c.l.b16 %v201
    %v665 = vunpack.c.h.b16 %v201
    %v666 = vunpack.c.l.b16 %v202
    %v667 = vunpack.c.h.b16 %v202
    %v668 = vunpack.c.l.b16 %v203
    %v669 = vunpack.c.h.b16 %v203
    %v670 = vunpack.c.l.b16 %v204
    %v671 = vunpack.c.h.b16 %v204
    %v672 = vunpack.c.l.b16 %v205
    %v673 = vunpack.c.h.b16 %v205
    %v674 = vpack.c.b16 %v434, %v418
    %v675 = vpack.c.b16 %v435, %v419
    %v676 = vpack.c.b16 %v436, %v420
    %v677 = vpack.c.b16 %v437, %v421
    %v678 = vpack.c.b16 %v438, %v422
    %v679 = vpack.c.b16 %v439, %v423
    %v680 = vpack.c.b16 %v440, %v424
    %v681 = vpack.c.b16 %v441, %v425
    %v682 = vpack.c.b16 %v442, %v426
    %v683 = vpack.c.b16 %v443, %v427
    %v684 = vpack.c.b16 %v444, %v428
    %v685 = vpack.c.b16 %v445, %v429
    %v686 = vpack.c.b16 %v446, %v430
    %v687 = vpack.c.b16 %v447, %v431
    %v688 = vpack.c.b16 %v448, %v432
    %v689 = vpack.c.b16 %v449, %v433
    %v690 = vpack.c.b16 %v466, %v450
    %v691 = vpack.c.b16 %v467, %v451
    %v692 = vpack.c.b16 %v468, %v452
    %v693 = vpack.c.b16 %v469, %v453
    %v694 = vpack.c.b16 %v470, %v454
    %v695 = vpack.c.b16 %v471, %v455
    %v696 = vpack.c.b16 %v472, %v456
    %v697 = vpack.c.b16 %v473, %v457
    %v698 = vpack.c.b16 %v474, %v458
    %v699 = vpack.c.b16 %v475, %v459
    %v700 = vpack.c.b16 %v476, %v460
    %v701 = vpack.c.b16 %v477, %v461
    %v702 = vpack.c.b16 %v478, %v462
    %v703 = vpack.c.b16 %v479, %v463
    %v704 = vpack.c.b16 %v480, %v464
    %v705 = vpack.c.b16 %v481, %v465
    %v706 = vpack.c.b16 %v498, %v482
    %v707 = vpack.c.b16 %v499, %v483
    %v708 = vpack.c.b16 %v500, %v484
    %v709 = vpack.c.b16 %v501, %v485
    %v710 = vpack.c.b16 %v502, %v486
    %v711 = vpack.c.b16 %v503, %v487
    %v712 = vpack.c.b16 %v504, %v488
    %v713 = vpack.c.b16 %v505, %v489
    %v714 = vpack.c.b16 %v506, %v490
    %v715 = vpack.c.b16 %v507, %v491
    %v716 = vpack.c.b16 %v508, %v492
    %v717 = vpack.c.b16 %v509, %v493
    %v718 = vpack.c.b16 %v510, %v494
    %v719 = vpack.c.b16 %v511, %v495
    %v720 = vpack.c.b16 %v512, %v496
    %v721 = vpack.c.b16 %v513, %v497
    %v722 = vpack.c.b16 %v530, %v514
    %v723 = vpack.c.b16 %v531, %v515
    %v724 = vpack.c.b16 %v532, %v516
    %v725 = vpack.c.b16 %v533, %v517
    %v726 = vpack.c.b16 %v534, %v518
    %v727 = vpack.c.b16 %v535, %v519
    %v728 = vpack.c.b16 %v536, %v520
    %v729 = vpack.c.b16 %v537, %v521
    %v730 = vpack.c.b16 %v538, %v522
    %v731 = vpack.c.b16 %v539, %v523
    %v732 = vpack.c.b16 %v540, %v524
    %v733 = vpack.c.b16 %v541, %v525
    %v734 = vpack.c.b16 %v542, %v526
    %v735 = vpack.c.b16 %v543, %v527
    %v736 = vpack.c.b16 %v544, %v528
    %v737 = vpack.c.b16 %v545, %v529
    %v738 = vpack.c.b16 %v562, %v546
    %v739 = vpack.c.b16 %v563, %v547
    %v740 = vpack.c.b16 %v564, %v548
    %v741 = vpack.c.b16 %v565, %v549
    %v742 = vpack.c.b16 %v566, %v550
    %v743 = vpack.c.b16 %v567, %v551
    %v744 = vpack.c.b16 %v568, %v552
    %v745 = vpack.c.b16 %v569, %v553
    %v746 = vpack.c.b16 %v570, %v554
    %v747 = vpack.c.b16 %v571, %v555
    %v748 = vpack.c.b16 %v572, %v556
    %v749 = vpack.c.b16 %v573, %v557
    %v750 = vpack.c.b16 %v574, %v558
    %v751 = vpack.c.b16 %v575, %v559
    %v752 = vpack.c.b16 %v576, %v560
    %v753 = vpack.c.b16 %v577, %v561
    %v754 = vpack.c.b16 %v594, %v578
    %v755 = vpack.c.b16 %v595, %v579
    %v756 = vpack.c.b16 %v596, %v580
    %v757 = vpack.c.b16 %v597, %v581
    %v758 = vpack.c.b16 %v598, %v582
    %v759 = vpack.c.b16 %v599, %v583
    %v760 = vpack.c.b16 %v600, %v584
    %v761 = vpack.c.b16 %v601, %v585
    %v762 = vpack.c.b16 %v602, %v586
    %v763 = vpack.c.b16 %v603, %v587
    %v764 = vpack.c.b16 %v604, %v588
    %v765 = vpack.c.b16 %v605, %v589
    %v766 = vpack.c.b16 %v606, %v590
    %v767 = vpack.c.b16 %v607, %v591
    %v768 = vpack.c.b16 %v608, %v592
    %v769 = vpack.c.b16 %v609, %v593
    %v770 = vpack.c.b16 %v626, %v610
    %v771 = vpack.c.b16 %v627, %v611
    %v772 = vpack.c.b16 %v628, %v612
    %v773 = vpack.c.b16 %v629, %v613
    %v774 = vpack.c.b16 %v630, %v614
    %v775 = vpack.c.b16 %v631, %v615
    %v776 = vpack.c.b16 %v632, %v616
    %v777 = vpack.c.b16 %v633, %v617
    %v778 = vpack.c.b16 %v634, %v618
    %v779 = vpack.c.b16 %v635, %v619
    %v780 = vpack.c.b16 %v636, %v620
    %v781 = vpack.c.b16 %v637, %v621
    %v782 = vpack.c.b16 %v638, %v622
    %v783 = vpack.c.b16 %v639, %v623
    %v784 = vpack.c.b16 %v640, %v624
    %v785 = vpack.c.b16 %v641, %v625
    %v786 = vpack.c.b16 %v658, %v642
    %v787 = vpack.c.b16 %v659, %v643
    %v788 = vpack.c.b16 %v660, %v644
    %v789 = vpack.c.b16 %v661, %v645
    %v790 = vpack.c.b16 %v662, %v646
    %v791 = vpack.c.b16 %v663, %v647
    %v792 = vpack.c.b16 %v664, %v648
    %v793 = vpack.c.b16 %v665, %v649
    %v794 = vpack.c.b16 %v666, %v650
    %v795 = vpack.c.b16 %v667, %v651
    %v796 = vpack.c.b16 %v668, %v652
    %v797 = vpack.c.b16 %v669, %v653
    %v798 = vpack.c.b16 %v670, %v654
    %v799 = vpack.c.b16 %v671, %v655
    %v800 = vpack.c.b16 %v672, %v656
    %v801 = vpack.c.b16 %v673, %v657
    %930 = vmatprep.subr.bf16.mxu0 %v675
    %931 = vmatpush1.bf16.msra.mxu0 %v674
    %932 = vmatprep.subr.bf16.mxu0 %v691
    %933 = vmatpush1.bf16.msra.mxu0 %v690
    %934 = vmatprep.subr.bf16.mxu0 %v707
    %935 = vmatpush1.bf16.msra.mxu0 %v706
    %936 = vmatprep.subr.bf16.mxu0 %v723
    %937 = vmatpush1.bf16.msra.mxu0 %v722
    %938 = vmatprep.subr.bf16.mxu0 %v739
    %939 = vmatpush1.bf16.msra.mxu0 %v738
    %940 = vmatprep.subr.bf16.mxu0 %v755
    %941 = vmatpush1.bf16.msra.mxu0 %v754
    %942 = vmatprep.subr.bf16.mxu0 %v771
    %943 = vmatpush1.bf16.msra.mxu0 %v770
    %944 = vmatprep.subr.bf16.mxu0 %v787
    %945 = vmatpush1.bf16.msra.mxu0 %v786
    %946 = vmatprep.subr.bf16.mxu0 0
    %947 = vmatpush1.bf16.msra.mxu0 0
    %948 = vmatprep.subr.bf16.mxu0 0
    %949 = vmatpush1.bf16.msra.mxu0 0
    %950 = vmatprep.subr.bf16.mxu0 0
    %951 = vmatpush1.bf16.msra.mxu0 0
    %952 = vmatprep.subr.bf16.mxu0 0
    %953 = vmatpush1.bf16.msra.mxu0 0
    %954 = vmatprep.subr.bf16.mxu0 0
    %955 = vmatpush1.bf16.msra.mxu0 0
    %956 = vmatprep.subr.bf16.mxu0 0
    %957 = vmatpush1.bf16.msra.mxu0 0
    %958 = vmatprep.subr.bf16.mxu0 0
    %959 = vmatpush1.bf16.msra.mxu0 0
    %960 = vmatprep.subr.bf16.mxu0 0
    %961 = vmatpush1.bf16.msra.mxu0 0
    %962 = vmatprep.mubr.bf16.mxu0 0
    %963 = vmatmul.mubr.bf16.gmra.mrb[0].mxu0 %v77
    %v964 = vpop.f32.mrb[0].mxu0
    %v965 = vadd.f32 %v213, %v964
    %v966 = vpop.f32.mrb[0].mxu0
    %v967 = vadd.f32 %v217, %v966
    %v968 = vpop.f32.mrb[0].mxu0
    %v969 = vadd.f32 %v213, %v968
    %v970 = vpop.f32.mrb[0].mxu0
    %v971 = vadd.f32 %v217, %v970
    %972 = vdwg.mxu0
    %973 = vmatprep.subr.bf16.mxu0 %v677
    %974 = vmatpush1.bf16.msra.mxu0 %v676
    %975 = vmatprep.subr.bf16.mxu0 %v693
    %976 = vmatpush1.bf16.msra.mxu0 %v692
    %977 = vmatprep.subr.bf16.mxu0 %v709
    %978 = vmatpush1.bf16.msra.mxu0 %v708
    %979 = vmatprep.subr.bf16.mxu0 %v725
    %980 = vmatpush1.bf16.msra.mxu0 %v724
    %981 = vmatprep.subr.bf16.mxu0 %v741
    %982 = vmatpush1.bf16.msra.mxu0 %v740
    %983 = vmatprep.subr.bf16.mxu0 %v757
    %984 = vmatpush1.bf16.msra.mxu0 %v756
    %985 = vmatprep.subr.bf16.mxu0 %v773
    %986 = vmatpush1.bf16.msra.mxu0 %v772
    %987 = vmatprep.subr.bf16.mxu0 %v789
    %988 = vmatpush1.bf16.msra.mxu0 %v788
    %989 = vmatprep.subr.bf16.mxu0 0
    %990 = vmatpush1.bf16.msra.mxu0 0
    %991 = vmatprep.subr.bf16.mxu0 0
    %992 = vmatpush1.bf16.msra.mxu0 0
    %993 = vmatprep.subr.bf16.mxu0 0
    %994 = vmatpush1.bf16.msra.mxu0 0
    %995 = vmatprep.subr.bf16.mxu0 0
    %996 = vmatpush1.bf16.msra.mxu0 0
    %997 = vmatprep.subr.bf16.mxu0 0
    %998 = vmatpush1.bf16.msra.mxu0 0
    %999 = vmatprep.subr.bf16.mxu0 0
    %1000 = vmatpush1.bf16.msra.mxu0 0
    %1001 = vmatprep.subr.bf16.mxu0 0
    %1002 = vmatpush1.bf16.msra.mxu0 0
    %1003 = vmatprep.subr.bf16.mxu0 0
    %1004 = vmatpush1.bf16.msra.mxu0 0
    %1005 = vmatprep.mubr.bf16.mxu0 0
    %1006 = vmatmul.mubr.bf16.gmra.mrb[0].mxu0 %v77
    %v1007 = vpop.f32.mrb[0].mxu0
    %v1008 = vadd.f32 %v221, %v1007
    %v1009 = vpop.f32.mrb[0].mxu0
    %v1010 = vadd.f32 %v225, %v1009
    %v1011 = vpop.f32.mrb[0].mxu0
    %v1012 = vadd.f32 %v221, %v1011
    %v1013 = vpop.f32.mrb[0].mxu0
    %v1014 = vadd.f32 %v225, %v1013
    %1015 = vdwg.mxu0
    %1016 = vmatprep.subr.bf16.mxu0 %v679
    %1017 = vmatpush1.bf16.msra.mxu0 %v678
    %1018 = vmatprep.subr.bf16.mxu0 %v695
    %1019 = vmatpush1.bf16.msra.mxu0 %v694
    %1020 = vmatprep.subr.bf16.mxu0 %v711
    %1021 = vmatpush1.bf16.msra.mxu0 %v710
    %1022 = vmatprep.subr.bf16.mxu0 %v727
    %1023 = vmatpush1.bf16.msra.mxu0 %v726
    %1024 = vmatprep.subr.bf16.mxu0 %v743
    %1025 = vmatpush1.bf16.msra.mxu0 %v742
    %1026 = vmatprep.subr.bf16.mxu0 %v759
    %1027 = vmatpush1.bf16.msra.mxu0 %v758
    %1028 = vmatprep.subr.bf16.mxu0 %v775
    %1029 = vmatpush1.bf16.msra.mxu0 %v774
    %1030 = vmatprep.subr.bf16.mxu0 %v791
    %1031 = vmatpush1.bf16.msra.mxu0 %v790
    %1032 = vmatprep.subr.bf16.mxu0 0
    %1033 = vmatpush1.bf16.msra.mxu0 0
    %1034 = vmatprep.subr.bf16.mxu0 0
    %1035 = vmatpush1.bf16.msra.mxu0 0
    %1036 = vmatprep.subr.bf16.mxu0 0
    %1037 = vmatpush1.bf16.msra.mxu0 0
    %1038 = vmatprep.subr.bf16.mxu0 0
    %1039 = vmatpush1.bf16.msra.mxu0 0
    %1040 = vmatprep.subr.bf16.mxu0 0
    %1041 = vmatpush1.bf16.msra.mxu0 0
    %1042 = vmatprep.subr.bf16.mxu0 0
    %1043 = vmatpush1.bf16.msra.mxu0 0
    %1044 = vmatprep.subr.bf16.mxu0 0
    %1045 = vmatpush1.bf16.msra.mxu0 0
    %1046 = vmatprep.subr.bf16.mxu0 0
    %1047 = vmatpush1.bf16.msra.mxu0 0
    %1048 = vmatprep.mubr.bf16.mxu0 0
    %1049 = vmatmul.mubr.bf16.gmra.mrb[0].mxu0 %v77
    %v1050 = vpop.f32.mrb[0].mxu0
    %v1051 = vadd.f32 %v229, %v1050
    %v1052 = vpop.f32.mrb[0].mxu0
    %v1053 = vadd.f32 %v233, %v1052
    %v1054 = vpop.f32.mrb[0].mxu0
    %v1055 = vadd.f32 %v229, %v1054
    %v1056 = vpop.f32.mrb[0].mxu0
    %v1057 = vadd.f32 %v233, %v1056
    %1058 = vdwg.mxu0
    %1059 = vmatprep.subr.bf16.mxu0 %v681
    %1060 = vmatpush1.bf16.msra.mxu0 %v680
    %1061 = vmatprep.subr.bf16.mxu0 %v697
    %1062 = vmatpush1.bf16.msra.mxu0 %v696
    %1063 = vmatprep.subr.bf16.mxu0 %v713
    %1064 = vmatpush1.bf16.msra.mxu0 %v712
    %1065 = vmatprep.subr.bf16.mxu0 %v729
    %1066 = vmatpush1.bf16.msra.mxu0 %v728
    %1067 = vmatprep.subr.bf16.mxu0 %v745
    %1068 = vmatpush1.bf16.msra.mxu0 %v744
    %1069 = vmatprep.subr.bf16.mxu0 %v761
    %1070 = vmatpush1.bf16.msra.mxu0 %v760
    %1071 = vmatprep.subr.bf16.mxu0 %v777
    %1072 = vmatpush1.bf16.msra.mxu0 %v776
    %1073 = vmatprep.subr.bf16.mxu0 %v793
    %1074 = vmatpush1.bf16.msra.mxu0 %v792
    %1075 = vmatprep.subr.bf16.mxu0 0
    %1076 = vmatpush1.bf16.msra.mxu0 0
    %1077 = vmatprep.subr.bf16.mxu0 0
    %1078 = vmatpush1.bf16.msra.mxu0 0
    %1079 = vmatprep.subr.bf16.mxu0 0
    %1080 = vmatpush1.bf16.msra.mxu0 0
    %1081 = vmatprep.subr.bf16.mxu0 0
    %1082 = vmatpush1.bf16.msra.mxu0 0
    %1083 = vmatprep.subr.bf16.mxu0 0
    %1084 = vmatpush1.bf16.msra.mxu0 0
    %1085 = vmatprep.subr.bf16.mxu0 0
    %1086 = vmatpush1.bf16.msra.mxu0 0
    %1087 = vmatprep.subr.bf16.mxu0 0
    %1088 = vmatpush1.bf16.msra.mxu0 0
    %1089 = vmatprep.subr.bf16.mxu0 0
    %1090 = vmatpush1.bf16.msra.mxu0 0
    %1091 = vmatprep.mubr.bf16.mxu0 0
    %1092 = vmatmul.mubr.bf16.gmra.mrb[0].mxu0 %v77
    %v1093 = vpop.f32.mrb[0].mxu0
    %v1094 = vadd.f32 %v237, %v1093
    %v1095 = vpop.f32.mrb[0].mxu0
    %v1096 = vadd.f32 %v241, %v1095
    %v1097 = vpop.f32.mrb[0].mxu0
    %v1098 = vadd.f32 %v237, %v1097
    %v1099 = vpop.f32.mrb[0].mxu0
    %v1100 = vadd.f32 %v241, %v1099
    %1101 = vdwg.mxu0
    %1102 = vmatprep.subr.bf16.mxu0 %v683
    %1103 = vmatpush1.bf16.msra.mxu0 %v682
    %1104 = vmatprep.subr.bf16.mxu0 %v699
    %1105 = vmatpush1.bf16.msra.mxu0 %v698
    %1106 = vmatprep.subr.bf16.mxu0 %v715
    %1107 = vmatpush1.bf16.msra.mxu0 %v714
    %1108 = vmatprep.subr.bf16.mxu0 %v731
    %1109 = vmatpush1.bf16.msra.mxu0 %v730
    %1110 = vmatprep.subr.bf16.mxu0 %v747
    %1111 = vmatpush1.bf16.msra.mxu0 %v746
    %1112 = vmatprep.subr.bf16.mxu0 %v763
    %1113 = vmatpush1.bf16.msra.mxu0 %v762
    %1114 = vmatprep.subr.bf16.mxu0 %v779
    %1115 = vmatpush1.bf16.msra.mxu0 %v778
    %1116 = vmatprep.subr.bf16.mxu0 %v795
    %1117 = vmatpush1.bf16.msra.mxu0 %v794
    %1118 = vmatprep.subr.bf16.mxu0 0
    %1119 = vmatpush1.bf16.msra.mxu0 0
    %1120 = vmatprep.subr.bf16.mxu0 0
    %1121 = vmatpush1.bf16.msra.mxu0 0
    %1122 = vmatprep.subr.bf16.mxu0 0
    %1123 = vmatpush1.bf16.msra.mxu0 0
    %1124 = vmatprep.subr.bf16.mxu0 0
    %1125 = vmatpush1.bf16.msra.mxu0 0
    %1126 = vmatprep.subr.bf16.mxu0 0
    %1127 = vmatpush1.bf16.msra.mxu0 0
    %1128 = vmatprep.subr.bf16.mxu0 0
    %1129 = vmatpush1.bf16.msra.mxu0 0
    %1130 = vmatprep.subr.bf16.mxu0 0
    %1131 = vmatpush1.bf16.msra.mxu0 0
    %1132 = vmatprep.subr.bf16.mxu0 0
    %1133 = vmatpush1.bf16.msra.mxu0 0
    %1134 = vmatprep.mubr.bf16.mxu0 0
    %1135 = vmatmul.mubr.bf16.gmra.mrb[0].mxu0 %v77
    %v1136 = vpop.f32.mrb[0].mxu0
    %v1137 = vadd.f32 %v245, %v1136
    %v1138 = vpop.f32.mrb[0].mxu0
    %v1139 = vadd.f32 %v249, %v1138
    %v1140 = vpop.f32.mrb[0].mxu0
    %v1141 = vadd.f32 %v245, %v1140
    %v1142 = vpop.f32.mrb[0].mxu0
    %v1143 = vadd.f32 %v249, %v1142
    %1144 = vdwg.mxu0
    %1145 = vmatprep.subr.bf16.mxu0 %v685
    %1146 = vmatpush1.bf16.msra.mxu0 %v684
    %1147 = vmatprep.subr.bf16.mxu0 %v701
    %1148 = vmatpush1.bf16.msra.mxu0 %v700
    %1149 = vmatprep.subr.bf16.mxu0 %v717
    %1150 = vmatpush1.bf16.msra.mxu0 %v716
    %1151 = vmatprep.subr.bf16.mxu0 %v733
    %1152 = vmatpush1.bf16.msra.mxu0 %v732
    %1153 = vmatprep.subr.bf16.mxu0 %v749
    %1154 = vmatpush1.bf16.msra.mxu0 %v748
    %1155 = vmatprep.subr.bf16.mxu0 %v765
    %1156 = vmatpush1.bf16.msra.mxu0 %v764
    %1157 = vmatprep.subr.bf16.mxu0 %v781
    %1158 = vmatpush1.bf16.msra.mxu0 %v780
    %1159 = vmatprep.subr.bf16.mxu0 %v797
    %1160 = vmatpush1.bf16.msra.mxu0 %v796
    %1161 = vmatprep.subr.bf16.mxu0 0
    %1162 = vmatpush1.bf16.msra.mxu0 0
    %1163 = vmatprep.subr.bf16.mxu0 0
    %1164 = vmatpush1.bf16.msra.mxu0 0
    %1165 = vmatprep.subr.bf16.mxu0 0
    %1166 = vmatpush1.bf16.msra.mxu0 0
    %1167 = vmatprep.subr.bf16.mxu0 0
    %1168 = vmatpush1.bf16.msra.mxu0 0
    %1169 = vmatprep.subr.bf16.mxu0 0
    %1170 = vmatpush1.bf16.msra.mxu0 0
    %1171 = vmatprep.subr.bf16.mxu0 0
    %1172 = vmatpush1.bf16.msra.mxu0 0
    %1173 = vmatprep.subr.bf16.mxu0 0
    %1174 = vmatpush1.bf16.msra.mxu0 0
    %1175 = vmatprep.subr.bf16.mxu0 0
    %1176 = vmatpush1.bf16.msra.mxu0 0
    %1177 = vmatprep.mubr.bf16.mxu0 0
    %1178 = vmatmul.mubr.bf16.gmra.mrb[0].mxu0 %v77
    %v1179 = vpop.f32.mrb[0].mxu0
    %v1180 = vadd.f32 %v253, %v1179
    %v1181 = vpop.f32.mrb[0].mxu0
    %v1182 = vadd.f32 %v257, %v1181
    %v1183 = vpop.f32.mrb[0].mxu0
    %v1184 = vadd.f32 %v253, %v1183
    %v1185 = vpop.f32.mrb[0].mxu0
    %v1186 = vadd.f32 %v257, %v1185
    %1187 = vdwg.mxu0
    %1188 = vmatprep.subr.bf16.mxu0 %v687
    %1189 = vmatpush1.bf16.msra.mxu0 %v686
    %1190 = vmatprep.subr.bf16.mxu0 %v703
    %1191 = vmatpush1.bf16.msra.mxu0 %v702
    %1192 = vmatprep.subr.bf16.mxu0 %v719
    %1193 = vmatpush1.bf16.msra.mxu0 %v718
    %1194 = vmatprep.subr.bf16.mxu0 %v735
    %1195 = vmatpush1.bf16.msra.mxu0 %v734
    %1196 = vmatprep.subr.bf16.mxu0 %v751
    %1197 = vmatpush1.bf16.msra.mxu0 %v750
    %1198 = vmatprep.subr.bf16.mxu0 %v767
    %1199 = vmatpush1.bf16.msra.mxu0 %v766
    %1200 = vmatprep.subr.bf16.mxu0 %v783
    %1201 = vmatpush1.bf16.msra.mxu0 %v782
    %1202 = vmatprep.subr.bf16.mxu0 %v799
    %1203 = vmatpush1.bf16.msra.mxu0 %v798
    %1204 = vmatprep.subr.bf16.mxu0 0
    %1205 = vmatpush1.bf16.msra.mxu0 0
    %1206 = vmatprep.subr.bf16.mxu0 0
    %1207 = vmatpush1.bf16.msra.mxu0 0
    %1208 = vmatprep.subr.bf16.mxu0 0
    %1209 = vmatpush1.bf16.msra.mxu0 0
    %1210 = vmatprep.subr.bf16.mxu0 0
    %1211 = vmatpush1.bf16.msra.mxu0 0
    %1212 = vmatprep.subr.bf16.mxu0 0
    %1213 = vmatpush1.bf16.msra.mxu0 0
    %1214 = vmatprep.subr.bf16.mxu0 0
    %1215 = vmatpush1.bf16.msra.mxu0 0
    %1216 = vmatprep.subr.bf16.mxu0 0
    %1217 = vmatpush1.bf16.msra.mxu0 0
    %1218 = vmatprep.subr.bf16.mxu0 0
    %1219 = vmatpush1.bf16.msra.mxu0 0
    %1220 = vmatprep.mubr.bf16.mxu0 0
    %1221 = vmatmul.mubr.bf16.gmra.mrb[0].mxu0 %v77
    %v1222 = vpop.f32.mrb[0].mxu0
    %v1223 = vadd.f32 %v261, %v1222
    %v1224 = vpop.f32.mrb[0].mxu0
    %v1225 = vadd.f32 %v265, %v1224
    %v1226 = vpop.f32.mrb[0].mxu0
    %v1227 = vadd.f32 %v261, %v1226
    %v1228 = vpop.f32.mrb[0].mxu0
    %v1229 = vadd.f32 %v265, %v1228
    %1230 = vdwg.mxu0
    %1231 = vmatprep.subr.bf16.mxu0 %v689
    %1232 = vmatpush1.bf16.msra.mxu0 %v688
    %1233 = vmatprep.subr.bf16.mxu0 %v705
    %1234 = vmatpush1.bf16.msra.mxu0 %v704
    %1235 = vmatprep.subr.bf16.mxu0 %v721
    %1236 = vmatpush1.bf16.msra.mxu0 %v720
    %1237 = vmatprep.subr.bf16.mxu0 %v737
    %1238 = vmatpush1.bf16.msra.mxu0 %v736
    %1239 = vmatprep.subr.bf16.mxu0 %v753
    %1240 = vmatpush1.bf16.msra.mxu0 %v752
    %1241 = vmatprep.subr.bf16.mxu0 %v769
    %1242 = vmatpush1.bf16.msra.mxu0 %v768
    %1243 = vmatprep.subr.bf16.mxu0 %v785
    %1244 = vmatpush1.bf16.msra.mxu0 %v784
    %1245 = vmatprep.subr.bf16.mxu0 %v801
    %1246 = vmatpush1.bf16.msra.mxu0 %v800
    %1247 = vmatprep.subr.bf16.mxu0 0
    %1248 = vmatpush1.bf16.msra.mxu0 0
    %1249 = vmatprep.subr.bf16.mxu0 0
    %1250 = vmatpush1.bf16.msra.mxu0 0
    %1251 = vmatprep.subr.bf16.mxu0 0
    %1252 = vmatpush1.bf16.msra.mxu0 0
    %1253 = vmatprep.subr.bf16.mxu0 0
    %1254 = vmatpush1.bf16.msra.mxu0 0
    %1255 = vmatprep.subr.bf16.mxu0 0
    %1256 = vmatpush1.bf16.msra.mxu0 0
    %1257 = vmatprep.subr.bf16.mxu0 0
    %1258 = vmatpush1.bf16.msra.mxu0 0
    %1259 = vmatprep.subr.bf16.mxu0 0
    %1260 = vmatpush1.bf16.msra.mxu0 0
    %1261 = vmatprep.subr.bf16.mxu0 0
    %1262 = vmatpush1.bf16.msra.mxu0 0
    %1263 = vmatprep.mubr.bf16.mxu0 0
    %1264 = vmatmul.mubr.bf16.gmra.mrb[0].mxu0 %v77
    %v1265 = vpop.f32.mrb[0].mxu0
    %v1266 = vadd.f32 %v269, %v1265
    %v1267 = vpop.f32.mrb[0].mxu0
    %v1268 = vadd.f32 %v273, %v1267
    %v1269 = vpop.f32.mrb[0].mxu0
    %v1270 = vadd.f32 %v269, %v1269
    %v1271 = vpop.f32.mrb[0].mxu0
    %v1272 = vadd.f32 %v273, %v1271
    %1273 = vdwg.mxu0
    %v1274 = vmax.f32 %v965, 0.0
    %v1275 = vmax.f32 %v967, 0.0
    %v1276 = vmax.f32 %v1008, 0.0
    %v1277 = vmax.f32 %v1010, 0.0
    %v1278 = vmax.f32 %v1051, 0.0
    %v1279 = vmax.f32 %v1053, 0.0
    %v1280 = vmax.f32 %v1094, 0.0
    %v1281 = vmax.f32 %v1096, 0.0
    %v1282 = vmax.f32 %v1137, 0.0
    %v1283 = vmax.f32 %v1139, 0.0
    %v1284 = vmax.f32 %v1180, 0.0
    %v1285 = vmax.f32 %v1182, 0.0
    %v1286 = vmax.f32 %v1223, 0.0
    %v1287 = vmax.f32 %v1225, 0.0
    %v1288 = vmax.f32 %v1266, 0.0
    %v1289 = vmax.f32 %v1268, 0.0
    %v1290 = vmax.f32 %v969, 0.0
    %v1291 = vmax.f32 %v971, 0.0
    %v1292 = vmax.f32 %v1012, 0.0
    %v1293 = vmax.f32 %v1014, 0.0
    %v1294 = vmax.f32 %v1055, 0.0
    %v1295 = vmax.f32 %v1057, 0.0
    %v1296 = vmax.f32 %v1098, 0.0
    %v1297 = vmax.f32 %v1100, 0.0
    %v1298 = vmax.f32 %v1141, 0.0
    %v1299 = vmax.f32 %v1143, 0.0
    %v1300 = vmax.f32 %v1184, 0.0
    %v1301 = vmax.f32 %v1186, 0.0
    %v1302 = vmax.f32 %v1227, 0.0
    %v1303 = vmax.f32 %v1229, 0.0
    %v1304 = vmax.f32 %v1270, 0.0
    %v1305 = vmax.f32 %v1272, 0.0
    %v1306 = vpack.c.bf16 %v1290, %v1274
    %v1307 = vpack.c.bf16 %v1291, %v1275
    %v1308 = vpack.c.bf16 %v1292, %v1276
    %v1309 = vpack.c.bf16 %v1293, %v1277
    %v1310 = vpack.c.bf16 %v1294, %v1278
    %v1311 = vpack.c.bf16 %v1295, %v1279
    %v1312 = vpack.c.bf16 %v1296, %v1280
    %v1313 = vpack.c.bf16 %v1297, %v1281
    %v1314 = vpack.c.bf16 %v1298, %v1282
    %v1315 = vpack.c.bf16 %v1299, %v1283
    %v1316 = vpack.c.bf16 %v1300, %v1284
    %v1317 = vpack.c.bf16 %v1301, %v1285
    %v1318 = vpack.c.bf16 %v1302, %v1286
    %v1319 = vpack.c.bf16 %v1303, %v1287
    %v1320 = vpack.c.bf16 %v1304, %v1288
    %v1321 = vpack.c.bf16 %v1305, %v1289
    %v1322 = vld [vmem:[#allocation8] sm:$0xf]
    %v1323 = vld [vmem:[#allocation8 + $0x4] sm:$0xf]
    %v1324 = vld [vmem:[#allocation8 + $0x8] sm:$0xf]
    %v1325 = vld [vmem:[#allocation8 + $0xc] sm:$0xf]
    %v1326 = vld [vmem:[#allocation8 + $0x10] sm:$0xf]
    %v1327 = vld [vmem:[#allocation8 + $0x14] sm:$0xf]
    %v1328 = vld [vmem:[#allocation8 + $0x18] sm:$0xf]
    %v1329 = vld [vmem:[#allocation8 + $0x1c] sm:$0xf]
    %v1330 = vld [vmem:[#allocation8 + $0x20] sm:$0xf]
    %v1331 = vld [vmem:[#allocation8 + $0x24] sm:$0xf]
    %v1332 = vld [vmem:[#allocation8 + $0x28] sm:$0xf]
    %v1333 = vld [vmem:[#allocation8 + $0x2c] sm:$0xf]
    %v1334 = vld [vmem:[#allocation8 + $0x30] sm:$0xf]
    %v1335 = vld [vmem:[#allocation8 + $0x34] sm:$0xf]
    %v1336 = vld [vmem:[#allocation8 + $0x38] sm:$0xf]
    %v1337 = vld [vmem:[#allocation8 + $0x3c] sm:$0xf]
    %v1338 = vld [vmem:[#allocation8 + $0x40] sm:$0xf]
    %v1339 = vld [vmem:[#allocation8 + $0x44] sm:$0xf]
    %v1340 = vld [vmem:[#allocation8 + $0x48] sm:$0xf]
    %v1341 = vld [vmem:[#allocation8 + $0x4c] sm:$0xf]
    %v1342 = vld [vmem:[#allocation8 + $0x50] sm:$0xf]
    %v1343 = vld [vmem:[#allocation8 + $0x54] sm:$0xf]
    %v1344 = vld [vmem:[#allocation8 + $0x58] sm:$0xf]
    %v1345 = vld [vmem:[#allocation8 + $0x5c] sm:$0xf]
    %v1346 = vld [vmem:[#allocation8 + $0x60] sm:$0xf]
    %v1347 = vld [vmem:[#allocation8 + $0x64] sm:$0xf]
    %v1348 = vld [vmem:[#allocation8 + $0x68] sm:$0xf]
    %v1349 = vld [vmem:[#allocation8 + $0x6c] sm:$0xf]
    %v1350 = vld [vmem:[#allocation8 + $0x70] sm:$0xf]
    %v1351 = vld [vmem:[#allocation8 + $0x74] sm:$0xf]
    %v1352 = vld [vmem:[#allocation8 + $0x78] sm:$0xf]
    %v1353 = vld [vmem:[#allocation8 + $0x7c] sm:$0xf]
    %v1354 = vld [vmem:[#allocation8 + $0x80] sm:$0xf]
    %v1355 = vld [vmem:[#allocation8 + $0x84] sm:$0xf]
    %v1356 = vld [vmem:[#allocation8 + $0x88] sm:$0xf]
    %v1357 = vld [vmem:[#allocation8 + $0x8c] sm:$0xf]
    %v1358 = vld [vmem:[#allocation8 + $0x90] sm:$0xf]
    %v1359 = vld [vmem:[#allocation8 + $0x94] sm:$0xf]
    %v1360 = vld [vmem:[#allocation8 + $0x98] sm:$0xf]
    %v1361 = vld [vmem:[#allocation8 + $0x9c] sm:$0xf]
    %v1362 = vld [vmem:[#allocation8 + $0xa0] sm:$0xf]
    %v1363 = vld [vmem:[#allocation8 + $0xa4] sm:$0xf]
    %v1364 = vld [vmem:[#allocation8 + $0xa8] sm:$0xf]
    %v1365 = vld [vmem:[#allocation8 + $0xac] sm:$0xf]
    %v1366 = vld [vmem:[#allocation8 + $0xb0] sm:$0xf]
    %v1367 = vld [vmem:[#allocation8 + $0xb4] sm:$0xf]
    %v1368 = vld [vmem:[#allocation8 + $0xb8] sm:$0xf]
    %v1369 = vld [vmem:[#allocation8 + $0xbc] sm:$0xf]
    %v1370 = vld [vmem:[#allocation8 + $0xc0] sm:$0xf]
    %v1371 = vld [vmem:[#allocation8 + $0xc4] sm:$0xf]
    %v1372 = vld [vmem:[#allocation8 + $0xc8] sm:$0xf]
    %v1373 = vld [vmem:[#allocation8 + $0xcc] sm:$0xf]
    %v1374 = vld [vmem:[#allocation8 + $0xd0] sm:$0xf]
    %v1375 = vld [vmem:[#allocation8 + $0xd4] sm:$0xf]
    %v1376 = vld [vmem:[#allocation8 + $0xd8] sm:$0xf]
    %v1377 = vld [vmem:[#allocation8 + $0xdc] sm:$0xf]
    %v1378 = vld [vmem:[#allocation8 + $0xe0] sm:$0xf]
    %v1379 = vld [vmem:[#allocation8 + $0xe4] sm:$0xf]
    %v1380 = vld [vmem:[#allocation8 + $0xe8] sm:$0xf]
    %v1381 = vld [vmem:[#allocation8 + $0xec] sm:$0xf]
    %v1382 = vld [vmem:[#allocation8 + $0xf0] sm:$0xf]
    %v1383 = vld [vmem:[#allocation8 + $0xf4] sm:$0xf]
    %v1384 = vld [vmem:[#allocation8 + $0xf8] sm:$0xf]
    %v1385 = vld [vmem:[#allocation8 + $0xfc] sm:$0xf]
    %v1386 = vld [vmem:[#allocation8 + $0x100] sm:$0xf]
    %v1387 = vld [vmem:[#allocation8 + $0x104] sm:$0xf]
    %v1388 = vld [vmem:[#allocation8 + $0x108] sm:$0xf]
    %v1389 = vld [vmem:[#allocation8 + $0x10c] sm:$0xf]
    %v1390 = vld [vmem:[#allocation8 + $0x110] sm:$0xf]
    %v1391 = vld [vmem:[#allocation8 + $0x114] sm:$0xf]
    %v1392 = vld [vmem:[#allocation8 + $0x118] sm:$0xf]
    %v1393 = vld [vmem:[#allocation8 + $0x11c] sm:$0xf]
    %v1394 = vld [vmem:[#allocation8 + $0x120] sm:$0xf]
    %v1395 = vld [vmem:[#allocation8 + $0x124] sm:$0xf]
    %v1396 = vld [vmem:[#allocation8 + $0x128] sm:$0xf]
    %v1397 = vld [vmem:[#allocation8 + $0x12c] sm:$0xf]
    %v1398 = vld [vmem:[#allocation8 + $0x130] sm:$0xf]
    %v1399 = vld [vmem:[#allocation8 + $0x134] sm:$0xf]
    %v1400 = vld [vmem:[#allocation8 + $0x138] sm:$0xf]
    %v1401 = vld [vmem:[#allocation8 + $0x13c] sm:$0xf]
    %v1402 = vld [vmem:[#allocation8 + $0x140] sm:$0xf]
    %v1403 = vld [vmem:[#allocation8 + $0x144] sm:$0xf]
    %v1404 = vld [vmem:[#allocation8 + $0x148] sm:$0xf]
    %v1405 = vld [vmem:[#allocation8 + $0x14c] sm:$0xf]
    %v1406 = vld [vmem:[#allocation8 + $0x150] sm:$0xf]
    %v1407 = vld [vmem:[#allocation8 + $0x154] sm:$0xf]
    %v1408 = vld [vmem:[#allocation8 + $0x158] sm:$0xf]
    %v1409 = vld [vmem:[#allocation8 + $0x15c] sm:$0xf]
    %v1410 = vld [vmem:[#allocation8 + $0x160] sm:$0xf]
    %v1411 = vld [vmem:[#allocation8 + $0x164] sm:$0xf]
    %v1412 = vld [vmem:[#allocation8 + $0x168] sm:$0xf]
    %v1413 = vld [vmem:[#allocation8 + $0x16c] sm:$0xf]
    %v1414 = vld [vmem:[#allocation8 + $0x170] sm:$0xf]
    %v1415 = vld [vmem:[#allocation8 + $0x174] sm:$0xf]
    %v1416 = vld [vmem:[#allocation8 + $0x178] sm:$0xf]
    %v1417 = vld [vmem:[#allocation8 + $0x17c] sm:$0xf]
    %v1418 = vld [vmem:[#allocation8 + $0x180] sm:$0xf]
    %v1419 = vld [vmem:[#allocation8 + $0x184] sm:$0xf]
    %v1420 = vld [vmem:[#allocation8 + $0x188] sm:$0xf]
    %v1421 = vld [vmem:[#allocation8 + $0x18c] sm:$0xf]
    %v1422 = vld [vmem:[#allocation8 + $0x190] sm:$0xf]
    %v1423 = vld [vmem:[#allocation8 + $0x194] sm:$0xf]
    %v1424 = vld [vmem:[#allocation8 + $0x198] sm:$0xf]
    %v1425 = vld [vmem:[#allocation8 + $0x19c] sm:$0xf]
    %v1426 = vld [vmem:[#allocation8 + $0x1a0] sm:$0xf]
    %v1427 = vld [vmem:[#allocation8 + $0x1a4] sm:$0xf]
    %v1428 = vld [vmem:[#allocation8 + $0x1a8] sm:$0xf]
    %v1429 = vld [vmem:[#allocation8 + $0x1ac] sm:$0xf]
    %v1430 = vld [vmem:[#allocation8 + $0x1b0] sm:$0xf]
    %v1431 = vld [vmem:[#allocation8 + $0x1b4] sm:$0xf]
    %v1432 = vld [vmem:[#allocation8 + $0x1b8] sm:$0xf]
    %v1433 = vld [vmem:[#allocation8 + $0x1bc] sm:$0xf]
    %v1434 = vld [vmem:[#allocation8 + $0x1c0] sm:$0xf]
    %v1435 = vld [vmem:[#allocation8 + $0x1c4] sm:$0xf]
    %v1436 = vld [vmem:[#allocation8 + $0x1c8] sm:$0xf]
    %v1437 = vld [vmem:[#allocation8 + $0x1cc] sm:$0xf]
    %v1438 = vld [vmem:[#allocation8 + $0x1d0] sm:$0xf]
    %v1439 = vld [vmem:[#allocation8 + $0x1d4] sm:$0xf]
    %v1440 = vld [vmem:[#allocation8 + $0x1d8] sm:$0xf]
    %v1441 = vld [vmem:[#allocation8 + $0x1dc] sm:$0xf]
    %v1442 = vld [vmem:[#allocation8 + $0x1e0] sm:$0xf]
    %v1443 = vld [vmem:[#allocation8 + $0x1e4] sm:$0xf]
    %v1444 = vld [vmem:[#allocation8 + $0x1e8] sm:$0xf]
    %v1445 = vld [vmem:[#allocation8 + $0x1ec] sm:$0xf]
    %v1446 = vld [vmem:[#allocation8 + $0x1f0] sm:$0xf]
    %v1447 = vld [vmem:[#allocation8 + $0x1f4] sm:$0xf]
    %v1448 = vld [vmem:[#allocation8 + $0x1f8] sm:$0xf]
    %v1449 = vld [vmem:[#allocation8 + $0x1fc] sm:$0xf]
    %v1450 = vld [vmem:[#allocation8 + $0x200] sm:$0xf]
    %v1451 = vld [vmem:[#allocation8 + $0x204] sm:$0xf]
    %v1452 = vld [vmem:[#allocation8 + $0x208] sm:$0xf]
    %v1453 = vld [vmem:[#allocation8 + $0x20c] sm:$0xf]
    %v1454 = vld [vmem:[#allocation8 + $0x210] sm:$0xf]
    %v1455 = vld [vmem:[#allocation8 + $0x214] sm:$0xf]
    %v1456 = vld [vmem:[#allocation8 + $0x218] sm:$0xf]
    %v1457 = vld [vmem:[#allocation8 + $0x21c] sm:$0xf]
    %v1458 = vld [vmem:[#allocation8 + $0x220] sm:$0xf]
    %v1459 = vld [vmem:[#allocation8 + $0x224] sm:$0xf]
    %v1460 = vld [vmem:[#allocation8 + $0x228] sm:$0xf]
    %v1461 = vld [vmem:[#allocation8 + $0x22c] sm:$0xf]
    %v1462 = vld [vmem:[#allocation8 + $0x230] sm:$0xf]
    %v1463 = vld [vmem:[#allocation8 + $0x234] sm:$0xf]
    %v1464 = vld [vmem:[#allocation8 + $0x238] sm:$0xf]
    %v1465 = vld [vmem:[#allocation8 + $0x23c] sm:$0xf]
    %v1466 = vld [vmem:[#allocation8 + $0x240] sm:$0xf]
    %v1467 = vld [vmem:[#allocation8 + $0x244] sm:$0xf]
    %v1468 = vld [vmem:[#allocation8 + $0x248] sm:$0xf]
    %v1469 = vld [vmem:[#allocation8 + $0x24c] sm:$0xf]
    %v1470 = vld [vmem:[#allocation8 + $0x250] sm:$0xf]
    %v1471 = vld [vmem:[#allocation8 + $0x254] sm:$0xf]
    %v1472 = vld [vmem:[#allocation8 + $0x258] sm:$0xf]
    %v1473 = vld [vmem:[#allocation8 + $0x25c] sm:$0xf]
    %v1474 = vld [vmem:[#allocation8 + $0x260] sm:$0xf]
    %v1475 = vld [vmem:[#allocation8 + $0x264] sm:$0xf]
    %v1476 = vld [vmem:[#allocation8 + $0x268] sm:$0xf]
    %v1477 = vld [vmem:[#allocation8 + $0x26c] sm:$0xf]
    %v1478 = vld [vmem:[#allocation8 + $0x270] sm:$0xf]
    %v1479 = vld [vmem:[#allocation8 + $0x274] sm:$0xf]
    %v1480 = vld [vmem:[#allocation8 + $0x278] sm:$0xf]
    %v1481 = vld [vmem:[#allocation8 + $0x27c] sm:$0xf]
    %v1482 = vld [vmem:[#allocation8 + $0x280] sm:$0xf]
    %v1483 = vld [vmem:[#allocation8 + $0x284] sm:$0xf]
    %v1484 = vld [vmem:[#allocation8 + $0x288] sm:$0xf]
    %v1485 = vld [vmem:[#allocation8 + $0x28c] sm:$0xf]
    %v1486 = vld [vmem:[#allocation8 + $0x290] sm:$0xf]
    %v1487 = vld [vmem:[#allocation8 + $0x294] sm:$0xf]
    %v1488 = vld [vmem:[#allocation8 + $0x298] sm:$0xf]
    %v1489 = vld [vmem:[#allocation8 + $0x29c] sm:$0xf]
    %v1490 = vld [vmem:[#allocation8 + $0x2a0] sm:$0xf]
    %v1491 = vld [vmem:[#allocation8 + $0x2a4] sm:$0xf]
    %v1492 = vld [vmem:[#allocation8 + $0x2a8] sm:$0xf]
    %v1493 = vld [vmem:[#allocation8 + $0x2ac] sm:$0xf]
    %v1494 = vld [vmem:[#allocation8 + $0x2b0] sm:$0xf]
    %v1495 = vld [vmem:[#allocation8 + $0x2b4] sm:$0xf]
    %v1496 = vld [vmem:[#allocation8 + $0x2b8] sm:$0xf]
    %v1497 = vld [vmem:[#allocation8 + $0x2bc] sm:$0xf]
    %v1498 = vld [vmem:[#allocation8 + $0x2c0] sm:$0xf]
    %v1499 = vld [vmem:[#allocation8 + $0x2c4] sm:$0xf]
    %v1500 = vld [vmem:[#allocation8 + $0x2c8] sm:$0xf]
    %v1501 = vld [vmem:[#allocation8 + $0x2cc] sm:$0xf]
    %v1502 = vld [vmem:[#allocation8 + $0x2d0] sm:$0xf]
    %v1503 = vld [vmem:[#allocation8 + $0x2d4] sm:$0xf]
    %v1504 = vld [vmem:[#allocation8 + $0x2d8] sm:$0xf]
    %v1505 = vld [vmem:[#allocation8 + $0x2dc] sm:$0xf]
    %v1506 = vld [vmem:[#allocation8 + $0x2e0] sm:$0xf]
    %v1507 = vld [vmem:[#allocation8 + $0x2e4] sm:$0xf]
    %v1508 = vld [vmem:[#allocation8 + $0x2e8] sm:$0xf]
    %v1509 = vld [vmem:[#allocation8 + $0x2ec] sm:$0xf]
    %v1510 = vld [vmem:[#allocation8 + $0x2f0] sm:$0xf]
    %v1511 = vld [vmem:[#allocation8 + $0x2f4] sm:$0xf]
    %v1512 = vld [vmem:[#allocation8 + $0x2f8] sm:$0xf]
    %v1513 = vld [vmem:[#allocation8 + $0x2fc] sm:$0xf]
    %v1514 = vld [vmem:[#allocation8 + $0x300] sm:$0xf]
    %v1515 = vld [vmem:[#allocation8 + $0x304] sm:$0xf]
    %v1516 = vld [vmem:[#allocation8 + $0x308] sm:$0xf]
    %v1517 = vld [vmem:[#allocation8 + $0x30c] sm:$0xf]
    %v1518 = vld [vmem:[#allocation8 + $0x310] sm:$0xf]
    %v1519 = vld [vmem:[#allocation8 + $0x314] sm:$0xf]
    %v1520 = vld [vmem:[#allocation8 + $0x318] sm:$0xf]
    %v1521 = vld [vmem:[#allocation8 + $0x31c] sm:$0xf]
    %v1522 = vld [vmem:[#allocation8 + $0x320] sm:$0xf]
    %v1523 = vld [vmem:[#allocation8 + $0x324] sm:$0xf]
    %v1524 = vld [vmem:[#allocation8 + $0x328] sm:$0xf]
    %v1525 = vld [vmem:[#allocation8 + $0x32c] sm:$0xf]
    %v1526 = vld [vmem:[#allocation8 + $0x330] sm:$0xf]
    %v1527 = vld [vmem:[#allocation8 + $0x334] sm:$0xf]
    %v1528 = vld [vmem:[#allocation8 + $0x338] sm:$0xf]
    %v1529 = vld [vmem:[#allocation8 + $0x33c] sm:$0xf]
    %v1530 = vld [vmem:[#allocation8 + $0x340] sm:$0xf]
    %v1531 = vld [vmem:[#allocation8 + $0x344] sm:$0xf]
    %v1532 = vld [vmem:[#allocation8 + $0x348] sm:$0xf]
    %v1533 = vld [vmem:[#allocation8 + $0x34c] sm:$0xf]
    %v1534 = vld [vmem:[#allocation8 + $0x350] sm:$0xf]
    %v1535 = vld [vmem:[#allocation8 + $0x354] sm:$0xf]
    %v1536 = vld [vmem:[#allocation8 + $0x358] sm:$0xf]
    %v1537 = vld [vmem:[#allocation8 + $0x35c] sm:$0xf]
    %v1538 = vld [vmem:[#allocation8 + $0x360] sm:$0xf]
    %v1539 = vld [vmem:[#allocation8 + $0x364] sm:$0xf]
    %v1540 = vld [vmem:[#allocation8 + $0x368] sm:$0xf]
    %v1541 = vld [vmem:[#allocation8 + $0x36c] sm:$0xf]
    %v1542 = vld [vmem:[#allocation8 + $0x370] sm:$0xf]
    %v1543 = vld [vmem:[#allocation8 + $0x374] sm:$0xf]
    %v1544 = vld [vmem:[#allocation8 + $0x378] sm:$0xf]
    %v1545 = vld [vmem:[#allocation8 + $0x37c] sm:$0xf]
    %v1546 = vld [vmem:[#allocation8 + $0x380] sm:$0xf]
    %v1547 = vld [vmem:[#allocation8 + $0x384] sm:$0xf]
    %v1548 = vld [vmem:[#allocation8 + $0x388] sm:$0xf]
    %v1549 = vld [vmem:[#allocation8 + $0x38c] sm:$0xf]
    %v1550 = vld [vmem:[#allocation8 + $0x390] sm:$0xf]
    %v1551 = vld [vmem:[#allocation8 + $0x394] sm:$0xf]
    %v1552 = vld [vmem:[#allocation8 + $0x398] sm:$0xf]
    %v1553 = vld [vmem:[#allocation8 + $0x39c] sm:$0xf]
    %v1554 = vld [vmem:[#allocation8 + $0x3a0] sm:$0xf]
    %v1555 = vld [vmem:[#allocation8 + $0x3a4] sm:$0xf]
    %v1556 = vld [vmem:[#allocation8 + $0x3a8] sm:$0xf]
    %v1557 = vld [vmem:[#allocation8 + $0x3ac] sm:$0xf]
    %v1558 = vld [vmem:[#allocation8 + $0x3b0] sm:$0xf]
    %v1559 = vld [vmem:[#allocation8 + $0x3b4] sm:$0xf]
    %v1560 = vld [vmem:[#allocation8 + $0x3b8] sm:$0xf]
    %v1561 = vld [vmem:[#allocation8 + $0x3bc] sm:$0xf]
    %v1562 = vld [vmem:[#allocation8 + $0x3c0] sm:$0xf]
    %v1563 = vld [vmem:[#allocation8 + $0x3c4] sm:$0xf]
    %v1564 = vld [vmem:[#allocation8 + $0x3c8] sm:$0xf]
    %v1565 = vld [vmem:[#allocation8 + $0x3cc] sm:$0xf]
    %v1566 = vld [vmem:[#allocation8 + $0x3d0] sm:$0xf]
    %v1567 = vld [vmem:[#allocation8 + $0x3d4] sm:$0xf]
    %v1568 = vld [vmem:[#allocation8 + $0x3d8] sm:$0xf]
    %v1569 = vld [vmem:[#allocation8 + $0x3dc] sm:$0xf]
    %v1570 = vld [vmem:[#allocation8 + $0x3e0] sm:$0xf]
    %v1571 = vld [vmem:[#allocation8 + $0x3e4] sm:$0xf]
    %v1572 = vld [vmem:[#allocation8 + $0x3e8] sm:$0xf]
    %v1573 = vld [vmem:[#allocation8 + $0x3ec] sm:$0xf]
    %v1574 = vld [vmem:[#allocation8 + $0x3f0] sm:$0xf]
    %v1575 = vld [vmem:[#allocation8 + $0x3f4] sm:$0xf]
    %v1576 = vld [vmem:[#allocation8 + $0x3f8] sm:$0xf]
    %v1577 = vld [vmem:[#allocation8 + $0x3fc] sm:$0xf]
    %v1578 = vld [vmem:[%s4] sm:$0x1]
    %v1580 = vlaneseq
    %v1581 = vshrl.u32 %v1580, 7
    %v1582 = vsub.s32 0, %v1581
    %v1583 = vrot.slane %v1578, %v1582
    %v1841 = vunpack.c.l.b16 %v1322
    %v1842 = vunpack.c.l.b16 %v1323
    %v1843 = vunpack.c.l.b16 %v1324
    %v1844 = vunpack.c.l.b16 %v1325
    %v1845 = vunpack.c.l.b16 %v1326
    %v1846 = vunpack.c.l.b16 %v1327
    %v1847 = vunpack.c.l.b16 %v1328
    %v1848 = vunpack.c.l.b16 %v1329
    %v1849 = vunpack.c.l.b16 %v1330
    %v1850 = vunpack.c.l.b16 %v1331
    %v1851 = vunpack.c.l.b16 %v1332
    %v1852 = vunpack.c.l.b16 %v1333
    %v1853 = vunpack.c.l.b16 %v1334
    %v1854 = vunpack.c.l.b16 %v1335
    %v1855 = vunpack.c.l.b16 %v1336
    %v1856 = vunpack.c.l.b16 %v1337
    %v1857 = vunpack.c.l.b16 %v1338
    %v1858 = vunpack.c.l.b16 %v1339
    %v1859 = vunpack.c.l.b16 %v1340
    %v1860 = vunpack.c.l.b16 %v1341
    %v1861 = vunpack.c.l.b16 %v1342
    %v1862 = vunpack.c.l.b16 %v1343
    %v1863 = vunpack.c.l.b16 %v1344
    %v1864 = vunpack.c.l.b16 %v1345
    %v1865 = vunpack.c.l.b16 %v1346
    %v1866 = vunpack.c.l.b16 %v1347
    %v1867 = vunpack.c.l.b16 %v1348
    %v1868 = vunpack.c.l.b16 %v1349
    %v1869 = vunpack.c.l.b16 %v1350
    %v1870 = vunpack.c.l.b16 %v1351
    %v1871 = vunpack.c.l.b16 %v1352
    %v1872 = vunpack.c.l.b16 %v1353
    %v1873 = vunpack.c.l.b16 %v1354
    %v1874 = vunpack.c.l.b16 %v1355
    %v1875 = vunpack.c.l.b16 %v1356
    %v1876 = vunpack.c.l.b16 %v1357
    %v1877 = vunpack.c.l.b16 %v1358
    %v1878 = vunpack.c.l.b16 %v1359
    %v1879 = vunpack.c.l.b16 %v1360
    %v1880 = vunpack.c.l.b16 %v1361
    %v1881 = vunpack.c.l.b16 %v1362
    %v1882 = vunpack.c.l.b16 %v1363
    %v1883 = vunpack.c.l.b16 %v1364
    %v1884 = vunpack.c.l.b16 %v1365
    %v1885 = vunpack.c.l.b16 %v1366
    %v1886 = vunpack.c.l.b16 %v1367
    %v1887 = vunpack.c.l.b16 %v1368
    %v1888 = vunpack.c.l.b16 %v1369
    %v1889 = vunpack.c.l.b16 %v1370
    %v1890 = vunpack.c.l.b16 %v1371
    %v1891 = vunpack.c.l.b16 %v1372
    %v1892 = vunpack.c.l.b16 %v1373
    %v1893 = vunpack.c.l.b16 %v1374
    %v1894 = vunpack.c.l.b16 %v1375
    %v1895 = vunpack.c.l.b16 %v1376
    %v1896 = vunpack.c.l.b16 %v1377
    %v1897 = vunpack.c.l.b16 %v1378
    %v1898 = vunpack.c.l.b16 %v1379
    %v1899 = vunpack.c.l.b16 %v1380
    %v1900 = vunpack.c.l.b16 %v1381
    %v1901 = vunpack.c.l.b16 %v1382
    %v1902 = vunpack.c.l.b16 %v1383
    %v1903 = vunpack.c.l.b16 %v1384
    %v1904 = vunpack.c.l.b16 %v1385
    %v1905 = vunpack.c.l.b16 %v1386
    %v1906 = vunpack.c.l.b16 %v1387
    %v1907 = vunpack.c.l.b16 %v1388
    %v1908 = vunpack.c.l.b16 %v1389
    %v1909 = vunpack.c.l.b16 %v1390
    %v1910 = vunpack.c.l.b16 %v1391
    %v1911 = vunpack.c.l.b16 %v1392
    %v1912 = vunpack.c.l.b16 %v1393
    %v1913 = vunpack.c.l.b16 %v1394
    %v1914 = vunpack.c.l.b16 %v1395
    %v1915 = vunpack.c.l.b16 %v1396
    %v1916 = vunpack.c.l.b16 %v1397
    %v1917 = vunpack.c.l.b16 %v1398
    %v1918 = vunpack.c.l.b16 %v1399
    %v1919 = vunpack.c.l.b16 %v1400
    %v1920 = vunpack.c.l.b16 %v1401
    %v1921 = vunpack.c.l.b16 %v1402
    %v1922 = vunpack.c.l.b16 %v1403
    %v1923 = vunpack.c.l.b16 %v1404
    %v1924 = vunpack.c.l.b16 %v1405
    %v1925 = vunpack.c.l.b16 %v1406
    %v1926 = vunpack.c.l.b16 %v1407
    %v1927 = vunpack.c.l.b16 %v1408
    %v1928 = vunpack.c.l.b16 %v1409
    %v1929 = vunpack.c.l.b16 %v1410
    %v1930 = vunpack.c.l.b16 %v1411
    %v1931 = vunpack.c.l.b16 %v1412
    %v1932 = vunpack.c.l.b16 %v1413
    %v1933 = vunpack.c.l.b16 %v1414
    %v1934 = vunpack.c.l.b16 %v1415
    %v1935 = vunpack.c.l.b16 %v1416
    %v1936 = vunpack.c.l.b16 %v1417
    %v1937 = vunpack.c.l.b16 %v1418
    %v1938 = vunpack.c.l.b16 %v1419
    %v1939 = vunpack.c.l.b16 %v1420
    %v1940 = vunpack.c.l.b16 %v1421
    %v1941 = vunpack.c.l.b16 %v1422
    %v1942 = vunpack.c.l.b16 %v1423
    %v1943 = vunpack.c.l.b16 %v1424
    %v1944 = vunpack.c.l.b16 %v1425
    %v1945 = vunpack.c.l.b16 %v1426
    %v1946 = vunpack.c.l.b16 %v1427
    %v1947 = vunpack.c.l.b16 %v1428
    %v1948 = vunpack.c.l.b16 %v1429
    %v1949 = vunpack.c.l.b16 %v1430
    %v1950 = vunpack.c.l.b16 %v1431
    %v1951 = vunpack.c.l.b16 %v1432
    %v1952 = vunpack.c.l.b16 %v1433
    %v1953 = vunpack.c.l.b16 %v1434
    %v1954 = vunpack.c.l.b16 %v1435
    %v1955 = vunpack.c.l.b16 %v1436
    %v1956 = vunpack.c.l.b16 %v1437
    %v1957 = vunpack.c.l.b16 %v1438
    %v1958 = vunpack.c.l.b16 %v1439
    %v1959 = vunpack.c.l.b16 %v1440
    %v1960 = vunpack.c.l.b16 %v1441
    %v1961 = vunpack.c.l.b16 %v1442
    %v1962 = vunpack.c.l.b16 %v1443
    %v1963 = vunpack.c.l.b16 %v1444
    %v1964 = vunpack.c.l.b16 %v1445
    %v1965 = vunpack.c.l.b16 %v1446
    %v1966 = vunpack.c.l.b16 %v1447
    %v1967 = vunpack.c.l.b16 %v1448
    %v1968 = vunpack.c.l.b16 %v1449
    %v1969 = vunpack.c.l.b16 %v1450
    %v1970 = vunpack.c.l.b16 %v1451
    %v1971 = vunpack.c.l.b16 %v1452
    %v1972 = vunpack.c.l.b16 %v1453
    %v1973 = vunpack.c.l.b16 %v1454
    %v1974 = vunpack.c.l.b16 %v1455
    %v1975 = vunpack.c.l.b16 %v1456
    %v1976 = vunpack.c.l.b16 %v1457
    %v1977 = vunpack.c.l.b16 %v1458
    %v1978 = vunpack.c.l.b16 %v1459
    %v1979 = vunpack.c.l.b16 %v1460
    %v1980 = vunpack.c.l.b16 %v1461
    %v1981 = vunpack.c.l.b16 %v1462
    %v1982 = vunpack.c.l.b16 %v1463
    %v1983 = vunpack.c.l.b16 %v1464
    %v1984 = vunpack.c.l.b16 %v1465
    %v1985 = vunpack.c.l.b16 %v1466
    %v1986 = vunpack.c.l.b16 %v1467
    %v1987 = vunpack.c.l.b16 %v1468
    %v1988 = vunpack.c.l.b16 %v1469
    %v1989 = vunpack.c.l.b16 %v1470
    %v1990 = vunpack.c.l.b16 %v1471
    %v1991 = vunpack.c.l.b16 %v1472
    %v1992 = vunpack.c.l.b16 %v1473
    %v1993 = vunpack.c.l.b16 %v1474
    %v1994 = vunpack.c.l.b16 %v1475
    %v1995 = vunpack.c.l.b16 %v1476
    %v1996 = vunpack.c.l.b16 %v1477
    %v1997 = vunpack.c.l.b16 %v1478
    %v1998 = vunpack.c.l.b16 %v1479
    %v1999 = vunpack.c.l.b16 %v1480
    %v2000 = vunpack.c.l.b16 %v1481
    %v2001 = vunpack.c.l.b16 %v1482
    %v2002 = vunpack.c.l.b16 %v1483
    %v2003 = vunpack.c.l.b16 %v1484
    %v2004 = vunpack.c.l.b16 %v1485
    %v2005 = vunpack.c.l.b16 %v1486
    %v2006 = vunpack.c.l.b16 %v1487
    %v2007 = vunpack.c.l.b16 %v1488
    %v2008 = vunpack.c.l.b16 %v1489
    %v2009 = vunpack.c.l.b16 %v1490
    %v2010 = vunpack.c.l.b16 %v1491
    %v2011 = vunpack.c.l.b16 %v1492
    %v2012 = vunpack.c.l.b16 %v1493
    %v2013 = vunpack.c.l.b16 %v1494
    %v2014 = vunpack.c.l.b16 %v1495
    %v2015 = vunpack.c.l.b16 %v1496
    %v2016 = vunpack.c.l.b16 %v1497
    %v2017 = vunpack.c.l.b16 %v1498
    %v2018 = vunpack.c.l.b16 %v1499
    %v2019 = vunpack.c.l.b16 %v1500
    %v2020 = vunpack.c.l.b16 %v1501
    %v2021 = vunpack.c.l.b16 %v1502
    %v2022 = vunpack.c.l.b16 %v1503
    %v2023 = vunpack.c.l.b16 %v1504
    %v2024 = vunpack.c.l.b16 %v1505
    %v2025 = vunpack.c.l.b16 %v1506
    %v2026 = vunpack.c.l.b16 %v1507
    %v2027 = vunpack.c.l.b16 %v1508
    %v2028 = vunpack.c.l.b16 %v1509
    %v2029 = vunpack.c.l.b16 %v1510
    %v2030 = vunpack.c.l.b16 %v1511
    %v2031 = vunpack.c.l.b16 %v1512
    %v2032 = vunpack.c.l.b16 %v1513
    %v2033 = vunpack.c.l.b16 %v1514
    %v2034 = vunpack.c.l.b16 %v1515
    %v2035 = vunpack.c.l.b16 %v1516
    %v2036 = vunpack.c.l.b16 %v1517
    %v2037 = vunpack.c.l.b16 %v1518
    %v2038 = vunpack.c.l.b16 %v1519
    %v2039 = vunpack.c.l.b16 %v1520
    %v2040 = vunpack.c.l.b16 %v1521
    %v2041 = vunpack.c.l.b16 %v1522
    %v2042 = vunpack.c.l.b16 %v1523
    %v2043 = vunpack.c.l.b16 %v1524
    %v2044 = vunpack.c.l.b16 %v1525
    %v2045 = vunpack.c.l.b16 %v1526
    %v2046 = vunpack.c.l.b16 %v1527
    %v2047 = vunpack.c.l.b16 %v1528
    %v2048 = vunpack.c.l.b16 %v1529
    %v2049 = vunpack.c.l.b16 %v1530
    %v2050 = vunpack.c.l.b16 %v1531
    %v2051 = vunpack.c.l.b16 %v1532
    %v2052 = vunpack.c.l.b16 %v1533
    %v2053 = vunpack.c.l.b16 %v1534
    %v2054 = vunpack.c.l.b16 %v1535
    %v2055 = vunpack.c.l.b16 %v1536
    %v2056 = vunpack.c.l.b16 %v1537
    %v2057 = vunpack.c.l.b16 %v1538
    %v2058 = vunpack.c.l.b16 %v1539
    %v2059 = vunpack.c.l.b16 %v1540
    %v2060 = vunpack.c.l.b16 %v1541
    %v2061 = vunpack.c.l.b16 %v1542
    %v2062 = vunpack.c.l.b16 %v1543
    %v2063 = vunpack.c.l.b16 %v1544
    %v2064 = vunpack.c.l.b16 %v1545
    %v2065 = vunpack.c.l.b16 %v1546
    %v2066 = vunpack.c.l.b16 %v1547
    %v2067 = vunpack.c.l.b16 %v1548
    %v2068 = vunpack.c.l.b16 %v1549
    %v2069 = vunpack.c.l.b16 %v1550
    %v2070 = vunpack.c.l.b16 %v1551
    %v2071 = vunpack.c.l.b16 %v1552
    %v2072 = vunpack.c.l.b16 %v1553
    %v2073 = vunpack.c.l.b16 %v1554
    %v2074 = vunpack.c.l.b16 %v1555
    %v2075 = vunpack.c.l.b16 %v1556
    %v2076 = vunpack.c.l.b16 %v1557
    %v2077 = vunpack.c.l.b16 %v1558
    %v2078 = vunpack.c.l.b16 %v1559
    %v2079 = vunpack.c.l.b16 %v1560
    %v2080 = vunpack.c.l.b16 %v1561
    %v2081 = vunpack.c.l.b16 %v1562
    %v2082 = vunpack.c.l.b16 %v1563
    %v2083 = vunpack.c.l.b16 %v1564
    %v2084 = vunpack.c.l.b16 %v1565
    %v2085 = vunpack.c.l.b16 %v1566
    %v2086 = vunpack.c.l.b16 %v1567
    %v2087 = vunpack.c.l.b16 %v1568
    %v2088 = vunpack.c.l.b16 %v1569
    %v2089 = vunpack.c.l.b16 %v1570
    %v2090 = vunpack.c.l.b16 %v1571
    %v2091 = vunpack.c.l.b16 %v1572
    %v2092 = vunpack.c.l.b16 %v1573
    %v2093 = vunpack.c.l.b16 %v1574
    %v2094 = vunpack.c.l.b16 %v1575
    %v2095 = vunpack.c.l.b16 %v1576
    %v2096 = vunpack.c.l.b16 %v1577
    %v2097 = vpack.c.b16 %v1842, %v1841
    %v2098 = vpack.c.b16 %v1844, %v1843
    %v2099 = vpack.c.b16 %v1846, %v1845
    %v2100 = vpack.c.b16 %v1848, %v1847
    %v2101 = vpack.c.b16 %v1850, %v1849
    %v2102 = vpack.c.b16 %v1852, %v1851
    %v2103 = vpack.c.b16 %v1854, %v1853
    %v2104 = vpack.c.b16 %v1856, %v1855
    %v2105 = vpack.c.b16 %v1858, %v1857
    %v2106 = vpack.c.b16 %v1860, %v1859
    %v2107 = vpack.c.b16 %v1862, %v1861
    %v2108 = vpack.c.b16 %v1864, %v1863
    %v2109 = vpack.c.b16 %v1866, %v1865
    %v2110 = vpack.c.b16 %v1868, %v1867
    %v2111 = vpack.c.b16 %v1870, %v1869
    %v2112 = vpack.c.b16 %v1872, %v1871
    %v2113 = vpack.c.b16 %v1874, %v1873
    %v2114 = vpack.c.b16 %v1876, %v1875
    %v2115 = vpack.c.b16 %v1878, %v1877
    %v2116 = vpack.c.b16 %v1880, %v1879
    %v2117 = vpack.c.b16 %v1882, %v1881
    %v2118 = vpack.c.b16 %v1884, %v1883
    %v2119 = vpack.c.b16 %v1886, %v1885
    %v2120 = vpack.c.b16 %v1888, %v1887
    %v2121 = vpack.c.b16 %v1890, %v1889
    %v2122 = vpack.c.b16 %v1892, %v1891
    %v2123 = vpack.c.b16 %v1894, %v1893
    %v2124 = vpack.c.b16 %v1896, %v1895
    %v2125 = vpack.c.b16 %v1898, %v1897
    %v2126 = vpack.c.b16 %v1900, %v1899
    %v2127 = vpack.c.b16 %v1902, %v1901
    %v2128 = vpack.c.b16 %v1904, %v1903
    %v2129 = vpack.c.b16 %v1906, %v1905
    %v2130 = vpack.c.b16 %v1908, %v1907
    %v2131 = vpack.c.b16 %v1910, %v1909
    %v2132 = vpack.c.b16 %v1912, %v1911
    %v2133 = vpack.c.b16 %v1914, %v1913
    %v2134 = vpack.c.b16 %v1916, %v1915
    %v2135 = vpack.c.b16 %v1918, %v1917
    %v2136 = vpack.c.b16 %v1920, %v1919
    %v2137 = vpack.c.b16 %v1922, %v1921
    %v2138 = vpack.c.b16 %v1924, %v1923
    %v2139 = vpack.c.b16 %v1926, %v1925
    %v2140 = vpack.c.b16 %v1928, %v1927
    %v2141 = vpack.c.b16 %v1930, %v1929
    %v2142 = vpack.c.b16 %v1932, %v1931
    %v2143 = vpack.c.b16 %v1934, %v1933
    %v2144 = vpack.c.b16 %v1936, %v1935
    %v2145 = vpack.c.b16 %v1938, %v1937
    %v2146 = vpack.c.b16 %v1940, %v1939
    %v2147 = vpack.c.b16 %v1942, %v1941
    %v2148 = vpack.c.b16 %v1944, %v1943
    %v2149 = vpack.c.b16 %v1946, %v1945
    %v2150 = vpack.c.b16 %v1948, %v1947
    %v2151 = vpack.c.b16 %v1950, %v1949
    %v2152 = vpack.c.b16 %v1952, %v1951
    %v2153 = vpack.c.b16 %v1954, %v1953
    %v2154 = vpack.c.b16 %v1956, %v1955
    %v2155 = vpack.c.b16 %v1958, %v1957
    %v2156 = vpack.c.b16 %v1960, %v1959
    %v2157 = vpack.c.b16 %v1962, %v1961
    %v2158 = vpack.c.b16 %v1964, %v1963
    %v2159 = vpack.c.b16 %v1966, %v1965
    %v2160 = vpack.c.b16 %v1968, %v1967
    %v2161 = vpack.c.b16 %v1970, %v1969
    %v2162 = vpack.c.b16 %v1972, %v1971
    %v2163 = vpack.c.b16 %v1974, %v1973
    %v2164 = vpack.c.b16 %v1976, %v1975
    %v2165 = vpack.c.b16 %v1978, %v1977
    %v2166 = vpack.c.b16 %v1980, %v1979
    %v2167 = vpack.c.b16 %v1982, %v1981
    %v2168 = vpack.c.b16 %v1984, %v1983
    %v2169 = vpack.c.b16 %v1986, %v1985
    %v2170 = vpack.c.b16 %v1988, %v1987
    %v2171 = vpack.c.b16 %v1990, %v1989
    %v2172 = vpack.c.b16 %v1992, %v1991
    %v2173 = vpack.c.b16 %v1994, %v1993
    %v2174 = vpack.c.b16 %v1996, %v1995
    %v2175 = vpack.c.b16 %v1998, %v1997
    %v2176 = vpack.c.b16 %v2000, %v1999
    %v2177 = vpack.c.b16 %v2002, %v2001
    %v2178 = vpack.c.b16 %v2004, %v2003
    %v2179 = vpack.c.b16 %v2006, %v2005
    %v2180 = vpack.c.b16 %v2008, %v2007
    %v2181 = vpack.c.b16 %v2010, %v2009
    %v2182 = vpack.c.b16 %v2012, %v2011
    %v2183 = vpack.c.b16 %v2014, %v2013
    %v2184 = vpack.c.b16 %v2016, %v2015
    %v2185 = vpack.c.b16 %v2018, %v2017
    %v2186 = vpack.c.b16 %v2020, %v2019
    %v2187 = vpack.c.b16 %v2022, %v2021
    %v2188 = vpack.c.b16 %v2024, %v2023
    %v2189 = vpack.c.b16 %v2026, %v2025
    %v2190 = vpack.c.b16 %v2028, %v2027
    %v2191 = vpack.c.b16 %v2030, %v2029
    %v2192 = vpack.c.b16 %v2032, %v2031
    %v2193 = vpack.c.b16 %v2034, %v2033
    %v2194 = vpack.c.b16 %v2036, %v2035
    %v2195 = vpack.c.b16 %v2038, %v2037
    %v2196 = vpack.c.b16 %v2040, %v2039
    %v2197 = vpack.c.b16 %v2042, %v2041
    %v2198 = vpack.c.b16 %v2044, %v2043
    %v2199 = vpack.c.b16 %v2046, %v2045
    %v2200 = vpack.c.b16 %v2048, %v2047
    %v2201 = vpack.c.b16 %v2050, %v2049
    %v2202 = vpack.c.b16 %v2052, %v2051
    %v2203 = vpack.c.b16 %v2054, %v2053
    %v2204 = vpack.c.b16 %v2056, %v2055
    %v2205 = vpack.c.b16 %v2058, %v2057
    %v2206 = vpack.c.b16 %v2060, %v2059
    %v2207 = vpack.c.b16 %v2062, %v2061
    %v2208 = vpack.c.b16 %v2064, %v2063
    %v2209 = vpack.c.b16 %v2066, %v2065
    %v2210 = vpack.c.b16 %v2068, %v2067
    %v2211 = vpack.c.b16 %v2070, %v2069
    %v2212 = vpack.c.b16 %v2072, %v2071
    %v2213 = vpack.c.b16 %v2074, %v2073
    %v2214 = vpack.c.b16 %v2076, %v2075
    %v2215 = vpack.c.b16 %v2078, %v2077
    %v2216 = vpack.c.b16 %v2080, %v2079
    %v2217 = vpack.c.b16 %v2082, %v2081
    %v2218 = vpack.c.b16 %v2084, %v2083
    %v2219 = vpack.c.b16 %v2086, %v2085
    %v2220 = vpack.c.b16 %v2088, %v2087
    %v2221 = vpack.c.b16 %v2090, %v2089
    %v2222 = vpack.c.b16 %v2092, %v2091
    %v2223 = vpack.c.b16 %v2094, %v2093
    %v2224 = vpack.c.b16 %v2096, %v2095
    %2353 = vmatprep.subr.bf16.mxu0 0
    %2354 = vmatpush1.bf16.msra.mxu0 %v2097
    %2355 = vmatprep.subr.bf16.mxu0 0
    %2356 = vmatpush1.bf16.msra.mxu0 %v2098
    %2357 = vmatprep.subr.bf16.mxu0 0
    %2358 = vmatpush1.bf16.msra.mxu0 %v2099
    %2359 = vmatprep.subr.bf16.mxu0 0
    %2360 = vmatpush1.bf16.msra.mxu0 %v2100
    %2361 = vmatprep.subr.bf16.mxu0 0
    %2362 = vmatpush1.bf16.msra.mxu0 %v2101
    %2363 = vmatprep.subr.bf16.mxu0 0
    %2364 = vmatpush1.bf16.msra.mxu0 %v2102
    %2365 = vmatprep.subr.bf16.mxu0 0
    %2366 = vmatpush1.bf16.msra.mxu0 %v2103
    %2367 = vmatprep.subr.bf16.mxu0 0
    %2368 = vmatpush1.bf16.msra.mxu0 %v2104
    %2369 = vmatprep.subr.bf16.mxu0 0
    %2370 = vmatpush1.bf16.msra.mxu0 %v2105
    %2371 = vmatprep.subr.bf16.mxu0 0
    %2372 = vmatpush1.bf16.msra.mxu0 %v2106
    %2373 = vmatprep.subr.bf16.mxu0 0
    %2374 = vmatpush1.bf16.msra.mxu0 %v2107
    %2375 = vmatprep.subr.bf16.mxu0 0
    %2376 = vmatpush1.bf16.msra.mxu0 %v2108
    %2377 = vmatprep.subr.bf16.mxu0 0
    %2378 = vmatpush1.bf16.msra.mxu0 %v2109
    %2379 = vmatprep.subr.bf16.mxu0 0
    %2380 = vmatpush1.bf16.msra.mxu0 %v2110
    %2381 = vmatprep.subr.bf16.mxu0 0
    %2382 = vmatpush1.bf16.msra.mxu0 %v2111
    %2383 = vmatprep.subr.bf16.mxu0 0
    %2384 = vmatpush1.bf16.msra.mxu0 %v2112
    %2385 = vmatprep.mubr.bf16.mxu0 %v1307
    %2386 = vmatmul.mubr.bf16.gmra.mrb[0].mxu0 %v1306
    %v2387 = vpop.f32.mrb[0].mxu0
    %v2388 = vadd.f32 %v1583, %v2387
    %v2389 = vpop.f32.mrb[0].mxu0
    %v2390 = vpop.f32.mrb[0].mxu0
    %v2391 = vadd.f32 %v1583, %v2390
    %v2392 = vpop.f32.mrb[0].mxu0
    %2393 = vdwg.mxu0
    %2394 = vmatprep.subr.bf16.mxu0 0
    %2395 = vmatpush1.bf16.msra.mxu0 %v2113
    %2396 = vmatprep.subr.bf16.mxu0 0
    %2397 = vmatpush1.bf16.msra.mxu0 %v2114
    %2398 = vmatprep.subr.bf16.mxu0 0
    %2399 = vmatpush1.bf16.msra.mxu0 %v2115
    %2400 = vmatprep.subr.bf16.mxu0 0
    %2401 = vmatpush1.bf16.msra.mxu0 %v2116
    %2402 = vmatprep.subr.bf16.mxu0 0
    %2403 = vmatpush1.bf16.msra.mxu0 %v2117
    %2404 = vmatprep.subr.bf16.mxu0 0
    %2405 = vmatpush1.bf16.msra.mxu0 %v2118
    %2406 = vmatprep.subr.bf16.mxu0 0
    %2407 = vmatpush1.bf16.msra.mxu0 %v2119
    %2408 = vmatprep.subr.bf16.mxu0 0
    %2409 = vmatpush1.bf16.msra.mxu0 %v2120
    %2410 = vmatprep.subr.bf16.mxu0 0
    %2411 = vmatpush1.bf16.msra.mxu0 %v2121
    %2412 = vmatprep.subr.bf16.mxu0 0
    %2413 = vmatpush1.bf16.msra.mxu0 %v2122
    %2414 = vmatprep.subr.bf16.mxu0 0
    %2415 = vmatpush1.bf16.msra.mxu0 %v2123
    %2416 = vmatprep.subr.bf16.mxu0 0
    %2417 = vmatpush1.bf16.msra.mxu0 %v2124
    %2418 = vmatprep.subr.bf16.mxu0 0
    %2419 = vmatpush1.bf16.msra.mxu0 %v2125
    %2420 = vmatprep.subr.bf16.mxu0 0
    %2421 = vmatpush1.bf16.msra.mxu0 %v2126
    %2422 = vmatprep.subr.bf16.mxu0 0
    %2423 = vmatpush1.bf16.msra.mxu0 %v2127
    %2424 = vmatprep.subr.bf16.mxu0 0
    %2425 = vmatpush1.bf16.msra.mxu0 %v2128
    %2426 = vmatprep.mubr.bf16.mxu0 %v1309
    %2427 = vmatmul.mubr.bf16.gmra.mrb[0].mxu0 %v1308
    %v2428 = vpop.f32.mrb[0].mxu0
    %v2429 = vadd.f32 %v2388, %v2428
    %v2430 = vpop.f32.mrb[0].mxu0
    %v2431 = vpop.f32.mrb[0].mxu0
    %v2432 = vadd.f32 %v2391, %v2431
    %v2433 = vpop.f32.mrb[0].mxu0
    %2434 = vdwg.mxu0
    %2435 = vmatprep.subr.bf16.mxu0 0
    %2436 = vmatpush1.bf16.msra.mxu0 %v2129
    %2437 = vmatprep.subr.bf16.mxu0 0
    %2438 = vmatpush1.bf16.msra.mxu0 %v2130
    %2439 = vmatprep.subr.bf16.mxu0 0
    %2440 = vmatpush1.bf16.msra.mxu0 %v2131
    %2441 = vmatprep.subr.bf16.mxu0 0
    %2442 = vmatpush1.bf16.msra.mxu0 %v2132
    %2443 = vmatprep.subr.bf16.mxu0 0
    %2444 = vmatpush1.bf16.msra.mxu0 %v2133
    %2445 = vmatprep.subr.bf16.mxu0 0
    %2446 = vmatpush1.bf16.msra.mxu0 %v2134
    %2447 = vmatprep.subr.bf16.mxu0 0
    %2448 = vmatpush1.bf16.msra.mxu0 %v2135
    %2449 = vmatprep.subr.bf16.mxu0 0
    %2450 = vmatpush1.bf16.msra.mxu0 %v2136
    %2451 = vmatprep.subr.bf16.mxu0 0
    %2452 = vmatpush1.bf16.msra.mxu0 %v2137
    %2453 = vmatprep.subr.bf16.mxu0 0
    %2454 = vmatpush1.bf16.msra.mxu0 %v2138
    %2455 = vmatprep.subr.bf16.mxu0 0
    %2456 = vmatpush1.bf16.msra.mxu0 %v2139
    %2457 = vmatprep.subr.bf16.mxu0 0
    %2458 = vmatpush1.bf16.msra.mxu0 %v2140
    %2459 = vmatprep.subr.bf16.mxu0 0
    %2460 = vmatpush1.bf16.msra.mxu0 %v2141
    %2461 = vmatprep.subr.bf16.mxu0 0
    %2462 = vmatpush1.bf16.msra.mxu0 %v2142
    %2463 = vmatprep.subr.bf16.mxu0 0
    %2464 = vmatpush1.bf16.msra.mxu0 %v2143
    %2465 = vmatprep.subr.bf16.mxu0 0
    %2466 = vmatpush1.bf16.msra.mxu0 %v2144
    %2467 = vmatprep.mubr.bf16.mxu0 %v1311
    %2468 = vmatmul.mubr.bf16.gmra.mrb[0].mxu0 %v1310
    %v2469 = vpop.f32.mrb[0].mxu0
    %v2470 = vadd.f32 %v2429, %v2469
    %v2471 = vpop.f32.mrb[0].mxu0
    %v2472 = vpop.f32.mrb[0].mxu0
    %v2473 = vadd.f32 %v2432, %v2472
    %v2474 = vpop.f32.mrb[0].mxu0
    %2475 = vdwg.mxu0
    %2476 = vmatprep.subr.bf16.mxu0 0
    %2477 = vmatpush1.bf16.msra.mxu0 %v2145
    %2478 = vmatprep.subr.bf16.mxu0 0
    %2479 = vmatpush1.bf16.msra.mxu0 %v2146
    %2480 = vmatprep.subr.bf16.mxu0 0
    %2481 = vmatpush1.bf16.msra.mxu0 %v2147
    %2482 = vmatprep.subr.bf16.mxu0 0
    %2483 = vmatpush1.bf16.msra.mxu0 %v2148
    %2484 = vmatprep.subr.bf16.mxu0 0
    %2485 = vmatpush1.bf16.msra.mxu0 %v2149
    %2486 = vmatprep.subr.bf16.mxu0 0
    %2487 = vmatpush1.bf16.msra.mxu0 %v2150
    %2488 = vmatprep.subr.bf16.mxu0 0
    %2489 = vmatpush1.bf16.msra.mxu0 %v2151
    %2490 = vmatprep.subr.bf16.mxu0 0
    %2491 = vmatpush1.bf16.msra.mxu0 %v2152
    %2492 = vmatprep.subr.bf16.mxu0 0
    %2493 = vmatpush1.bf16.msra.mxu0 %v2153
    %2494 = vmatprep.subr.bf16.mxu0 0
    %2495 = vmatpush1.bf16.msra.mxu0 %v2154
    %2496 = vmatprep.subr.bf16.mxu0 0
    %2497 = vmatpush1.bf16.msra.mxu0 %v2155
    %2498 = vmatprep.subr.bf16.mxu0 0
    %2499 = vmatpush1.bf16.msra.mxu0 %v2156
    %2500 = vmatprep.subr.bf16.mxu0 0
    %2501 = vmatpush1.bf16.msra.mxu0 %v2157
    %2502 = vmatprep.subr.bf16.mxu0 0
    %2503 = vmatpush1.bf16.msra.mxu0 %v2158
    %2504 = vmatprep.subr.bf16.mxu0 0
    %2505 = vmatpush1.bf16.msra.mxu0 %v2159
    %2506 = vmatprep.subr.bf16.mxu0 0
    %2507 = vmatpush1.bf16.msra.mxu0 %v2160
    %2508 = vmatprep.mubr.bf16.mxu0 %v1313
    %2509 = vmatmul.mubr.bf16.gmra.mrb[0].mxu0 %v1312
    %v2510 = vpop.f32.mrb[0].mxu0
    %v2511 = vadd.f32 %v2470, %v2510
    %v2512 = vpop.f32.mrb[0].mxu0
    %v2513 = vpop.f32.mrb[0].mxu0
    %v2514 = vadd.f32 %v2473, %v2513
    %v2515 = vpop.f32.mrb[0].mxu0
    %2516 = vdwg.mxu0
    %2517 = vmatprep.subr.bf16.mxu0 0
    %2518 = vmatpush1.bf16.msra.mxu0 %v2161
    %2519 = vmatprep.subr.bf16.mxu0 0
    %2520 = vmatpush1.bf16.msra.mxu0 %v2162
    %2521 = vmatprep.subr.bf16.mxu0 0
    %2522 = vmatpush1.bf16.msra.mxu0 %v2163
    %2523 = vmatprep.subr.bf16.mxu0 0
    %2524 = vmatpush1.bf16.msra.mxu0 %v2164
    %2525 = vmatprep.subr.bf16.mxu0 0
    %2526 = vmatpush1.bf16.msra.mxu0 %v2165
    %2527 = vmatprep.subr.bf16.mxu0 0
    %2528 = vmatpush1.bf16.msra.mxu0 %v2166
    %2529 = vmatprep.subr.bf16.mxu0 0
    %2530 = vmatpush1.bf16.msra.mxu0 %v2167
    %2531 = vmatprep.subr.bf16.mxu0 0
    %2532 = vmatpush1.bf16.msra.mxu0 %v2168
    %2533 = vmatprep.subr.bf16.mxu0 0
    %2534 = vmatpush1.bf16.msra.mxu0 %v2169
    %2535 = vmatprep.subr.bf16.mxu0 0
    %2536 = vmatpush1.bf16.msra.mxu0 %v2170
    %2537 = vmatprep.subr.bf16.mxu0 0
    %2538 = vmatpush1.bf16.msra.mxu0 %v2171
    %2539 = vmatprep.subr.bf16.mxu0 0
    %2540 = vmatpush1.bf16.msra.mxu0 %v2172
    %2541 = vmatprep.subr.bf16.mxu0 0
    %2542 = vmatpush1.bf16.msra.mxu0 %v2173
    %2543 = vmatprep.subr.bf16.mxu0 0
    %2544 = vmatpush1.bf16.msra.mxu0 %v2174
    %2545 = vmatprep.subr.bf16.mxu0 0
    %2546 = vmatpush1.bf16.msra.mxu0 %v2175
    %2547 = vmatprep.subr.bf16.mxu0 0
    %2548 = vmatpush1.bf16.msra.mxu0 %v2176
    %2549 = vmatprep.mubr.bf16.mxu0 %v1315
    %2550 = vmatmul.mubr.bf16.gmra.mrb[0].mxu0 %v1314
    %v2551 = vpop.f32.mrb[0].mxu0
    %v2552 = vadd.f32 %v2511, %v2551
    %v2553 = vpop.f32.mrb[0].mxu0
    %v2554 = vpop.f32.mrb[0].mxu0
    %v2555 = vadd.f32 %v2514, %v2554
    %v2556 = vpop.f32.mrb[0].mxu0
    %2557 = vdwg.mxu0
    %2558 = vmatprep.subr.bf16.mxu0 0
    %2559 = vmatpush1.bf16.msra.mxu0 %v2177
    %2560 = vmatprep.subr.bf16.mxu0 0
    %2561 = vmatpush1.bf16.msra.mxu0 %v2178
    %2562 = vmatprep.subr.bf16.mxu0 0
    %2563 = vmatpush1.bf16.msra.mxu0 %v2179
    %2564 = vmatprep.subr.bf16.mxu0 0
    %2565 = vmatpush1.bf16.msra.mxu0 %v2180
    %2566 = vmatprep.subr.bf16.mxu0 0
    %2567 = vmatpush1.bf16.msra.mxu0 %v2181
    %2568 = vmatprep.subr.bf16.mxu0 0
    %2569 = vmatpush1.bf16.msra.mxu0 %v2182
    %2570 = vmatprep.subr.bf16.mxu0 0
    %2571 = vmatpush1.bf16.msra.mxu0 %v2183
    %2572 = vmatprep.subr.bf16.mxu0 0
    %2573 = vmatpush1.bf16.msra.mxu0 %v2184
    %2574 = vmatprep.subr.bf16.mxu0 0
    %2575 = vmatpush1.bf16.msra.mxu0 %v2185
    %2576 = vmatprep.subr.bf16.mxu0 0
    %2577 = vmatpush1.bf16.msra.mxu0 %v2186
    %2578 = vmatprep.subr.bf16.mxu0 0
    %2579 = vmatpush1.bf16.msra.mxu0 %v2187
    %2580 = vmatprep.subr.bf16.mxu0 0
    %2581 = vmatpush1.bf16.msra.mxu0 %v2188
    %2582 = vmatprep.subr.bf16.mxu0 0
    %2583 = vmatpush1.bf16.msra.mxu0 %v2189
    %2584 = vmatprep.subr.bf16.mxu0 0
    %2585 = vmatpush1.bf16.msra.mxu0 %v2190
    %2586 = vmatprep.subr.bf16.mxu0 0
    %2587 = vmatpush1.bf16.msra.mxu0 %v2191
    %2588 = vmatprep.subr.bf16.mxu0 0
    %2589 = vmatpush1.bf16.msra.mxu0 %v2192
    %2590 = vmatprep.mubr.bf16.mxu0 %v1317
    %2591 = vmatmul.mubr.bf16.gmra.mrb[0].mxu0 %v1316
    %v2592 = vpop.f32.mrb[0].mxu0
    %v2593 = vadd.f32 %v2552, %v2592
    %v2594 = vpop.f32.mrb[0].mxu0
    %v2595 = vpop.f32.mrb[0].mxu0
    %v2596 = vadd.f32 %v2555, %v2595
    %v2597 = vpop.f32.mrb[0].mxu0
    %2598 = vdwg.mxu0
    %2599 = vmatprep.subr.bf16.mxu0 0
    %2600 = vmatpush1.bf16.msra.mxu0 %v2193
    %2601 = vmatprep.subr.bf16.mxu0 0
    %2602 = vmatpush1.bf16.msra.mxu0 %v2194
    %2603 = vmatprep.subr.bf16.mxu0 0
    %2604 = vmatpush1.bf16.msra.mxu0 %v2195
    %2605 = vmatprep.subr.bf16.mxu0 0
    %2606 = vmatpush1.bf16.msra.mxu0 %v2196
    %2607 = vmatprep.subr.bf16.mxu0 0
    %2608 = vmatpush1.bf16.msra.mxu0 %v2197
    %2609 = vmatprep.subr.bf16.mxu0 0
    %2610 = vmatpush1.bf16.msra.mxu0 %v2198
    %2611 = vmatprep.subr.bf16.mxu0 0
    %2612 = vmatpush1.bf16.msra.mxu0 %v2199
    %2613 = vmatprep.subr.bf16.mxu0 0
    %2614 = vmatpush1.bf16.msra.mxu0 %v2200
    %2615 = vmatprep.subr.bf16.mxu0 0
    %2616 = vmatpush1.bf16.msra.mxu0 %v2201
    %2617 = vmatprep.subr.bf16.mxu0 0
    %2618 = vmatpush1.bf16.msra.mxu0 %v2202
    %2619 = vmatprep.subr.bf16.mxu0 0
    %2620 = vmatpush1.bf16.msra.mxu0 %v2203
    %2621 = vmatprep.subr.bf16.mxu0 0
    %2622 = vmatpush1.bf16.msra.mxu0 %v2204
    %2623 = vmatprep.subr.bf16.mxu0 0
    %2624 = vmatpush1.bf16.msra.mxu0 %v2205
    %2625 = vmatprep.subr.bf16.mxu0 0
    %2626 = vmatpush1.bf16.msra.mxu0 %v2206
    %2627 = vmatprep.subr.bf16.mxu0 0
    %2628 = vmatpush1.bf16.msra.mxu0 %v2207
    %2629 = vmatprep.subr.bf16.mxu0 0
    %2630 = vmatpush1.bf16.msra.mxu0 %v2208
    %2631 = vmatprep.mubr.bf16.mxu0 %v1319
    %2632 = vmatmul.mubr.bf16.gmra.mrb[0].mxu0 %v1318
    %v2633 = vpop.f32.mrb[0].mxu0
    %v2634 = vadd.f32 %v2593, %v2633
    %v2635 = vpop.f32.mrb[0].mxu0
    %v2636 = vpop.f32.mrb[0].mxu0
    %v2637 = vadd.f32 %v2596, %v2636
    %v2638 = vpop.f32.mrb[0].mxu0
    %2639 = vdwg.mxu0
    %2640 = vmatprep.subr.bf16.mxu0 0
    %2641 = vmatpush1.bf16.msra.mxu0 %v2209
    %2642 = vmatprep.subr.bf16.mxu0 0
    %2643 = vmatpush1.bf16.msra.mxu0 %v2210
    %2644 = vmatprep.subr.bf16.mxu0 0
    %2645 = vmatpush1.bf16.msra.mxu0 %v2211
    %2646 = vmatprep.subr.bf16.mxu0 0
    %2647 = vmatpush1.bf16.msra.mxu0 %v2212
    %2648 = vmatprep.subr.bf16.mxu0 0
    %2649 = vmatpush1.bf16.msra.mxu0 %v2213
    %2650 = vmatprep.subr.bf16.mxu0 0
    %2651 = vmatpush1.bf16.msra.mxu0 %v2214
    %2652 = vmatprep.subr.bf16.mxu0 0
    %2653 = vmatpush1.bf16.msra.mxu0 %v2215
    %2654 = vmatprep.subr.bf16.mxu0 0
    %2655 = vmatpush1.bf16.msra.mxu0 %v2216
    %2656 = vmatprep.subr.bf16.mxu0 0
    %2657 = vmatpush1.bf16.msra.mxu0 %v2217
    %2658 = vmatprep.subr.bf16.mxu0 0
    %2659 = vmatpush1.bf16.msra.mxu0 %v2218
    %2660 = vmatprep.subr.bf16.mxu0 0
    %2661 = vmatpush1.bf16.msra.mxu0 %v2219
    %2662 = vmatprep.subr.bf16.mxu0 0
    %2663 = vmatpush1.bf16.msra.mxu0 %v2220
    %2664 = vmatprep.subr.bf16.mxu0 0
    %2665 = vmatpush1.bf16.msra.mxu0 %v2221
    %2666 = vmatprep.subr.bf16.mxu0 0
    %2667 = vmatpush1.bf16.msra.mxu0 %v2222
    %2668 = vmatprep.subr.bf16.mxu0 0
    %2669 = vmatpush1.bf16.msra.mxu0 %v2223
    %2670 = vmatprep.subr.bf16.mxu0 0
    %2671 = vmatpush1.bf16.msra.mxu0 %v2224
    %2672 = vmatprep.mubr.bf16.mxu0 %v1321
    %2673 = vmatmul.mubr.bf16.gmra.mrb[0].mxu0 %v1320
    %v2674 = vpop.f32.mrb[0].mxu0
    %v2675 = vadd.f32 %v2634, %v2674
    %v2676 = vpop.f32.mrb[0].mxu0
    %v2677 = vpop.f32.mrb[0].mxu0
    %v2678 = vadd.f32 %v2637, %v2677
    %v2679 = vpop.f32.mrb[0].mxu0
    %2680 = vdwg.mxu0
    %2681 = vst [vmem:[#allocation10] sm:$0xff] %v2675
    %2682 = vst [vmem:[#allocation10 + $0x8] sm:$0xff] %v2678
    // Predicated region
    $region38: #{tpu_custom_call.1} parent=1 // pred_check
      _
    $region39: #{tpu_custom_call.1} parent=1 // pred_check_branch
      %2684 = sbr.rel (0) target = $region41
    $region40: #{tpu_custom_call.1} parent=1 // pred_region
      %s2686 = ssub.s32 256, 256
      %2687 = vsyncadd [#allocation4], %s2686
      %s2688 = sshll.u32 [#allocation10], 4
      %s2689 = int_to_ptr.vmem [resolvable:$true] %s2688
      %2694 = dma.vmem_to_hbm [thread:$0]  %s2689, 256, %s5, [#allocation4], 128, 128, 8
    $region41: #{tpu_custom_call.1} parent=1 // pred_fallthru
      _
    // Predicated region
    $region42: #{tpu_custom_call.1} parent=1 // pred_check
      _
    $region43: #{tpu_custom_call.1} parent=1 // pred_check_branch
      %2696 = sbr.rel (0) target = $region45
    $region44: #{tpu_custom_call.1} parent=1 // pred_region
      %2697 = dma.done [#allocation4], 256
    $region45: #{tpu_custom_call.1} parent=1 // pred_fallthru
      _
    %2698 = vsyncpa [#allocation3], 1
    %2699 = vsyncpa [#allocation6], 1
    %2700 = vsyncpa [#allocation9], 1
    %2701 = vsyncpa [#allocation4], 1

</llo_original>
